<compile_context>
chip_gen: v6e
topology: v6e:2x2x1
jax: 0.10.0
libtpu: 0.0.40
codegen_flags: <defaults>
</compile_context>

<pallas_src>
import functools

import jax
import jax.numpy as jnp
from jax import lax
from jax.experimental import pallas as pl
from jax.experimental.pallas import tpu as pltpu


_LANE = 128
_SUBLANE = 8
_MM_DTYPE = jnp.bfloat16  # MXU operand dtype; accumulation + (h, c) state stay f32.


def _round_up(x, m):
    return (x + m - 1) // m * m


def _largest_divisor_leq(n, cap):
    """Largest divisor of n that is <= cap (padded time steps would change h)."""
    cap = max(1, min(n, cap))
    for d in range(cap, 0, -1):
        if n % d == 0:
            return d
    return 1


# ----------------------------------------------------------------------------
# Fused kernel
# ----------------------------------------------------------------------------
def _make_kernel(num_layers, n_chunks, Tc, B_blk, D_p, H_p, unroll):
    """grid = (batch_block, time_chunk, layer); semantics (parallel, arb, arb).

    Refs:
      x_ref     (Tc, B_blk, D_p)   bf16   streamed input chunk (layer 0 only)
      wih_ref   (1, D_p, 4H_p)     bf16   this layer's W_ih^T (per-gate-block padded)
      whh_ref   (1, H_p, 4H_p)     bf16   this layer's W_hh^T
      b_ref     (1, 1, 4H_p)       f32    fused bias b_ih + b_hh
      fcw_ref   (H_p, O_p)         bf16   final Linear weight^T
      fcb_ref   (1, O_p)           f32    final Linear bias
      out_ref   (B_blk, O_p)       f32    written once at the last (chunk, layer)
    Scratch (persist across grid steps):
      gx_ref    (Tc, B_blk, 4H_p)  bf16   hoisted gate projections (+bias) for chunk
      hchunk    (Tc, B_blk, D_p)   bf16   current chunk's input / hidden sequence
      h_st,c_st (L, B_blk, H_p)    f32    carried recurrent state per layer
    """
    G = 4 * H_p

    def kernel(x_ref, wih_ref, whh_ref, b_ref, fcw_ref, fcb_ref, out_ref,
               gx_ref, hchunk_ref, h_st, c_st):
        t_chunk = pl.program_id(1)
        layer = pl.program_id(2)

        # First chunk of a (batch block, layer): reset carried (h, c) -> zeros,
        # matching torch.zeros h0/c0.
        @pl.when(t_chunk == 0)
        def _():
            h_st[layer] = jnp.zeros((B_blk, H_p), jnp.float32)
            c_st[layer] = jnp.zeros((B_blk, H_p), jnp.float32)

        # Layer 0 consumes the streamed x chunk; deeper layers consume the previous
        # layer's hidden chunk that is already sitting in hchunk_ref (written at the
        # immediately preceding grid step).  In-place reuse is safe: the chunk is
        # fully consumed by the projection below before the recurrence overwrites it.
        @pl.when(layer == 0)
        def _():
            hchunk_ref[...] = x_ref[...]

        # Hoisted per-chunk input projection (one big MXU matmul), bias folded in.
        xin = hchunk_ref[...].reshape(Tc * B_blk, D_p)
        gx = jnp.dot(xin, wih_ref[0], preferred_element_type=jnp.float32)
        gx = gx + b_ref[0]                                   # gate order [i, f, o, g]
        gx_ref[...] = gx.reshape(Tc, B_blk, G).astype(gx_ref.dtype)

        whh = whh_ref[0]                                     # (H_p, 4H_p) bf16
        h0 = h_st[layer]
        c0 = c_st[layer]

        # Recurrence: only h @ W_hh^T + elementwise per step on the critical path.
        def step(t, carry):
            h, c = carry                                     # f32 (B_blk, H_p)
            gates = gx_ref[t].astype(jnp.float32) + jnp.dot(
                h.astype(_MM_DTYPE), whh, preferred_element_type=jnp.float32)
            ifo = jax.nn.sigmoid(gates[:, :3 * H_p])         # one wide EUP slab
            g_g = jnp.tanh(gates[:, 3 * H_p:])
            i_g = ifo[:, :H_p]
            f_g = ifo[:, H_p:2 * H_p]
            o_g = ifo[:, 2 * H_p:]
            c_new = f_g * c + i_g * g_g
            h_new = o_g * jnp.tanh(c_new)
            # Feed the next layer (same chunk, next grid step).
            if D_p == H_p:
                hchunk_ref[t] = h_new.astype(hchunk_ref.dtype)
            else:
                hchunk_ref[t, :, :H_p] = h_new.astype(hchunk_ref.dtype)
            return h_new, c_new

        h_last, c_last = lax.fori_loop(0, Tc, step, (h0, c0), unroll=unroll)
        h_st[layer] = h_last
        c_st[layer] = c_last

        # Final Linear fused in: only the last layer's h_T feeds the fc.
        @pl.when(jnp.logical_and(t_chunk == n_chunks - 1, layer == num_layers - 1))
        def _():
            out_ref[...] = (
                jnp.dot(h_last.astype(_MM_DTYPE), fcw_ref[...],
                        preferred_element_type=jnp.float32)
                + fcb_ref[...]).astype(out_ref.dtype)

    return kernel


# ----------------------------------------------------------------------------
# Parameter preparation (once): reorder gates, transpose, fuse bias, pad, cast, stack
# ----------------------------------------------------------------------------
def _gate_reorder(a, H):
    """PyTorch gate blocks [i, f, g, o] -> [i, f, o, g] along axis 0."""
    return jnp.concatenate(
        [a[:H], a[H:2 * H], a[3 * H:4 * H], a[2 * H:3 * H]], axis=0)


def _pad_gate_cols(wt, H, H_p):
    """wt: (D, 4H) -> (D, 4*H_p), zero-padding each gate block to H_p lanes."""
    blocks = [wt[:, k * H:(k + 1) * H] for k in range(4)]
    blocks = [jnp.pad(b, ((0, 0), (0, H_p - H))) for b in blocks]
    return jnp.concatenate(blocks, axis=1)


def prepare_params(params, input_dim, hidden_dim, num_layers, output_dim):
    H = hidden_dim
    H_p = _round_up(H, _LANE)
    D0_p = _round_up(input_dim, _LANE)
    O_p = _round_up(output_dim, _LANE)
    D_p = max(D0_p, H_p)  # common padded feature width so all layers' W_ih stack

    wih_l, whh_l, bias_l = [], [], []
    for layer, (w_ih, w_hh, b_ih, b_hh) in enumerate(params["lstm"]):
        D_in = input_dim if layer == 0 else hidden_dim
        w_ih_t = _pad_gate_cols(_gate_reorder(w_ih, H).T, H, H_p)   # (D_in, 4H_p)
        w_ih_t = jnp.pad(w_ih_t, ((0, D_p - D_in), (0, 0)))         # (D_p, 4H_p)
        w_hh_t = _pad_gate_cols(_gate_reorder(w_hh, H).T, H, H_p)
        w_hh_t = jnp.pad(w_hh_t, ((0, H_p - H), (0, 0)))            # (H_p, 4H_p)
        bias = _pad_gate_cols(_gate_reorder(b_ih + b_hh, H)[None, :], H, H_p)
        wih_l.append(w_ih_t)
        whh_l.append(w_hh_t)
        bias_l.append(bias)

    wih_all = jnp.stack(wih_l).astype(_MM_DTYPE)       # (L, D_p, 4H_p)
    whh_all = jnp.stack(whh_l).astype(_MM_DTYPE)       # (L, H_p, 4H_p)
    bias_all = jnp.stack(bias_l).astype(jnp.float32)   # (L, 1, 4H_p)

    fc_w = jnp.pad(params["fc_w"].T,
                   ((0, H_p - H), (0, O_p - output_dim))).astype(_MM_DTYPE)
    fc_b = jnp.pad(params["fc_b"], (0, O_p - output_dim))[None, :].astype(jnp.float32)
    return {"wih": wih_all, "whh": whh_all, "bias": bias_all,
            "fc_w": fc_w, "fc_b": fc_b}


# ----------------------------------------------------------------------------
# Forward wrapper
# ----------------------------------------------------------------------------
@functools.partial(jax.jit, static_argnames=("output_dim", "t_chunk"))
def lstm_forward(x, wih_all, whh_all, bias_all, fc_w, fc_b, *,
                 output_dim, t_chunk=None):
    """x: (B, T, input_dim) f32 -> (B, output_dim) f32."""
    B, T, D_in = x.shape
    L, D_p, G = wih_all.shape
    H_p = whh_all.shape[1]
    O_p = fc_w.shape[1]
    B_p = _round_up(max(B, _SUBLANE), _SUBLANE)

    # Batch-parallel blocks: >1 only when the batch spans >= 2 sublane tiles
    # (feeds the 2nd TensorCore on v7x; degenerate size-1 axis otherwise).
    n_b = 2 if (B_p >= 16 and B_p % 16 == 0) else 1
    B_blk = B_p // n_b

    # Time-chunk size: keep per-chunk buffers to a few MiB and require Tc | T.
    if t_chunk is None:
        per_step = B_blk * (G * 2 + 3 * D_p * 2)   # gx + hchunk + 2x x-chunk bytes
        t_chunk = _largest_divisor_leq(T, max(1, (8 << 20) // per_step))
    else:
        assert T % t_chunk == 0, "t_chunk must divide the sequence length"
    Tc = int(t_chunk)
    n_chunks = T // Tc

    # Unroll bounded by vreg pressure: one (B_blk, 4H_p) f32 gate slab per step.
    unroll = int(max(1, min(8, Tc, (96 * 1024) // (B_blk * G * 4))))

    # Time-major, padded, bf16 input (see TODO at top for folding this in).
    x_t = jnp.transpose(x, (1, 0, 2))                             # (T, B, D_in)
    x_t = jnp.pad(x_t, ((0, 0), (0, B_p - B), (0, D_p - D_in))).astype(_MM_DTYPE)

    kernel = _make_kernel(L, n_chunks, Tc, B_blk, D_p, H_p, unroll)

    grid = (n_b, n_chunks, L)
    in_specs = [
        pl.BlockSpec((Tc, B_blk, D_p), lambda b, t, l: (t, b, 0)),   # x chunk
        pl.BlockSpec((1, D_p, G), lambda b, t, l: (l, 0, 0)),        # W_ih^T (layer l)
        pl.BlockSpec((1, H_p, G), lambda b, t, l: (l, 0, 0)),        # W_hh^T (layer l)
        pl.BlockSpec((1, 1, G), lambda b, t, l: (l, 0, 0)),          # bias   (layer l)
        pl.BlockSpec((H_p, O_p), lambda b, t, l: (0, 0)),            # fc_w
        pl.BlockSpec((1, O_p), lambda b, t, l: (0, 0)),              # fc_b
    ]
    out_spec = pl.BlockSpec((B_blk, O_p), lambda b, t, l: (b, 0))
    scratch = [
        pltpu.VMEM((Tc, B_blk, G), _MM_DTYPE),        # gx chunk (bf16)
        pltpu.VMEM((Tc, B_blk, D_p), _MM_DTYPE),      # current chunk hidden/input
        pltpu.VMEM((L, B_blk, H_p), jnp.float32),     # carried h per layer
        pltpu.VMEM((L, B_blk, H_p), jnp.float32),     # carried c per layer
    ]

    # Scoped-VMEM budget, capped below the physical VMEM of this generation.
    try:
        vmem_cap = int(pltpu.get_tpu_info().vmem_capacity_bytes)
    except Exception:
        vmem_cap = 64 << 20  # v7x lower bound
    blk_bytes = (Tc * B_blk * D_p * 2 + D_p * G * 2 + H_p * G * 2 + G * 4)
    needed = (2 * blk_bytes                                  # double-buffered inputs
              + 2 * (H_p * O_p * 2 + O_p * 4)                # fc
              + 2 * B_blk * O_p * 4                          # output
              + Tc * B_blk * G * 2 + Tc * B_blk * D_p * 2    # gx + hchunk scratch
              + 2 * L * B_blk * H_p * 4)                     # carried state
    vmem_limit = int(min(vmem_cap * 7 // 8,
                         max(32 << 20, needed * 3 // 2 + (4 << 20))))

    # Advisory cost: HBM traffic only (weights are re-streamed once per chunk).
    flops = L * (2 * T * B_p * D_p * G + 2 * T * B_p * H_p * G) + 2 * B_p * H_p * O_p
    transcendentals = L * T * B_p * 5 * H_p
    hbm_bytes = (x_t.size * 2
                 + n_b * n_chunks * (wih_all.size * 2 + whh_all.size * 2
                                     + bias_all.size * 4)
                 + fc_w.size * 2 + fc_b.size * 4 + B_p * O_p * 4)

    out = pl.pallas_call(
        kernel,
        out_shape=jax.ShapeDtypeStruct((B_p, O_p), jnp.float32),
        grid=grid,
        in_specs=in_specs,
        out_specs=out_spec,
        scratch_shapes=scratch,
        compiler_params=pltpu.CompilerParams(
            dimension_semantics=("parallel", "arbitrary", "arbitrary"),
            vmem_limit_bytes=vmem_limit),
        cost_estimate=pl.CostEstimate(flops=int(flops),
                                      transcendentals=int(transcendentals),
                                      bytes_accessed=int(hbm_bytes)),
    )(x_t, wih_all, whh_all, bias_all, fc_w, fc_b)

    return out[:B, :output_dim]


# ----------------------------------------------------------------------------
# Deterministic parameter init (PyTorch nn.LSTM / nn.Linear shapes)
# ----------------------------------------------------------------------------
def init_params(key, input_dim, hidden_dim, num_layers, output_dim):
    params = {"lstm": []}
    bound = 1.0 / jnp.sqrt(hidden_dim)
    for layer in range(num_layers):
        in_dim = input_dim if layer == 0 else hidden_dim
        key, k1, k2, k3, k4 = jax.random.split(key, 5)
        w_ih = jax.random.uniform(k1, (4 * hidden_dim, in_dim), jnp.float32, -bound, bound)
        w_hh = jax.random.uniform(k2, (4 * hidden_dim, hidden_dim), jnp.float32, -bound, bound)
        b_ih = jax.random.uniform(k3, (4 * hidden_dim,), jnp.float32, -bound, bound)
        b_hh = jax.random.uniform(k4, (4 * hidden_dim,), jnp.float32, -bound, bound)
        params["lstm"].append((w_ih, w_hh, b_ih, b_hh))
    key, k5, k6 = jax.random.split(key, 3)
    params["fc_w"] = jax.random.uniform(k5, (output_dim, hidden_dim), jnp.float32, -bound, bound)
    params["fc_b"] = jax.random.uniform(k6, (output_dim,), jnp.float32, -bound, bound)
    return params


# ----------------------------------------------------------------------------
# Pure-JAX f32 reference (sanity check only; PyTorch gate order [i, f, g, o])
# ----------------------------------------------------------------------------
def lstm_model_ref(x, params):
    B = x.shape[0]
    seq = x
    for (w_ih, w_hh, b_ih, b_hh) in params["lstm"]:
        H = w_hh.shape[1]
        h = jnp.zeros((B, H), jnp.float32)
        c = jnp.zeros((B, H), jnp.float32)
        outs = []
        for t in range(seq.shape[1]):
            g = seq[:, t, :] @ w_ih.T + h @ w_hh.T + b_ih + b_hh
            i = jax.nn.sigmoid(g[:, 0:H])
            f = jax.nn.sigmoid(g[:, H:2 * H])
            gg = jnp.tanh(g[:, 2 * H:3 * H])
            o = jax.nn.sigmoid(g[:, 3 * H:4 * H])
            c = f * c + i * gg
            h = o * jnp.tanh(c)
            outs.append(h)
        seq = jnp.stack(outs, axis=1)
    return seq[:, -1, :] @ params["fc_w"].T + params["fc_b"]


if __name__ == "__main__":
    B, T = 2, 8
    input_dim, hidden_dim, num_layers, output_dim = 16, 32, 2, 8

    key = jax.random.PRNGKey(0)
    key, kx, kp = jax.random.split(key, 3)
    x = jax.random.normal(kx, (B, T, input_dim), jnp.float32)
    params = init_params(kp, input_dim, hidden_dim, num_layers, output_dim)

    prepped = prepare_params(params, input_dim, hidden_dim, num_layers, output_dim)
    # t_chunk=4 splits T=8 into 2 chunks so the scratch-carried (h, c) path runs.
    out = lstm_forward(x, prepped["wih"], prepped["whh"], prepped["bias"],
                       prepped["fc_w"], prepped["fc_b"],
                       output_dim=output_dim, t_chunk=4)
    out = jax.block_until_ready(out)

    ref = lstm_model_ref(x, params)
    assert out.shape == (B, output_dim)
    # bf16 MXU operands + bf16 gx chunk storage (f32 accumulation and f32 c/h state)
    # deviate slightly from the pure-f32 reference; tolerance reflects bf16 rounding.
    max_err = float(jnp.max(jnp.abs(out - ref)))
    assert jnp.allclose(out, ref, atol=3e-2, rtol=3e-2), (
        f"mismatch vs pure-JAX reference (max abs err {max_err})")

    print("KERNEL_OK")
</pallas_src>

<mosaic_0001>
module attributes {stable_mosaic.version = 11 : i64} {
  func.func @kernel(%arg0: i32, %arg1: i32, %arg2: i32, %arg3: memref<4x8x128xbf16, #tpu.memory_space<vmem>>, %arg4: memref<1x128x512xbf16, #tpu.memory_space<vmem>>, %arg5: memref<1x128x512xbf16, #tpu.memory_space<vmem>>, %arg6: memref<1x1x512xf32, #tpu.memory_space<vmem>>, %arg7: memref<128x128xbf16, #tpu.memory_space<vmem>>, %arg8: memref<1x128xf32, #tpu.memory_space<vmem>>, %arg9: memref<8x128xf32, #tpu.memory_space<vmem>>, %arg10: memref<4x8x512xbf16, #tpu.memory_space<vmem>>, %arg11: memref<4x8x128xbf16, #tpu.memory_space<vmem>>, %arg12: memref<2x8x128xf32, #tpu.memory_space<vmem>>, %arg13: memref<2x8x128xf32, #tpu.memory_space<vmem>>) attributes {dimension_semantics = [#tpu.dimension_semantics<parallel>, #tpu.dimension_semantics<arbitrary>, #tpu.dimension_semantics<arbitrary>], iteration_bounds = array<i64: 1, 2, 2>, scalar_prefetch = 0 : i64, scratch_operands = 4 : i64, tpu.core_type = #tpu.core_type<tc>, window_params = [{transform_indices = @transform_0, window_bounds = array<i64: 4, 8, 128>}, {transform_indices = @transform_1, window_bounds = array<i64: 1, 128, 512>}, {transform_indices = @transform_2, window_bounds = array<i64: 1, 128, 512>}, {transform_indices = @transform_3, window_bounds = array<i64: 1, 1, 512>}, {pipeline_mode = #tpu.pipeline_mode<synchronous>, transform_indices = @transform_4, window_bounds = array<i64: 128, 128>}, {pipeline_mode = #tpu.pipeline_mode<synchronous>, transform_indices = @transform_5, window_bounds = array<i64: 1, 128>}, {transform_indices = @transform_6, window_bounds = array<i64: 8, 128>}]} {
    %c0_i32 = arith.constant 0 : i32
    %0 = arith.cmpi eq, %arg1, %c0_i32 : i32
    %1 = arith.extui %0 : i1 to i32
    %c0_i32_0 = arith.constant 0 : i32
    %2 = arith.cmpi ne, %1, %c0_i32_0 : i32
    scf.if %2 {
      %cst_53 = arith.constant 0.000000e+00 : f32
      %151 = vector.broadcast %cst_53 : f32 to vector<8x128xf32>
      %152 = arith.index_cast %arg2 : i32 to index
      %c0_54 = arith.constant 0 : index
      %c0_55 = arith.constant 0 : index
      %153 = vector.load %arg12[%152, %c0_54, %c0_55] : memref<2x8x128xf32, #tpu.memory_space<vmem>>, vector<1x8x128xf32>
      %154 = vector.shape_cast %153 : vector<1x8x128xf32> to vector<8x128xf32>
      %155 = vector.shape_cast %151 : vector<8x128xf32> to vector<1x8x128xf32>
      tpu.vector_store %arg12[%152, %c0_54, %c0_55], %155 {strides = array<i32>} : memref<2x8x128xf32, #tpu.memory_space<vmem>>, vector<1x8x128xf32>,
      %cst_56 = arith.constant 0.000000e+00 : f32
      %156 = vector.broadcast %cst_56 : f32 to vector<8x128xf32>
      %157 = arith.index_cast %arg2 : i32 to index
      %c0_57 = arith.constant 0 : index
      %c0_58 = arith.constant 0 : index
      %158 = vector.load %arg13[%157, %c0_57, %c0_58] : memref<2x8x128xf32, #tpu.memory_space<vmem>>, vector<1x8x128xf32>
      %159 = vector.shape_cast %158 : vector<1x8x128xf32> to vector<8x128xf32>
      %160 = vector.shape_cast %156 : vector<8x128xf32> to vector<1x8x128xf32>
      tpu.vector_store %arg13[%157, %c0_57, %c0_58], %160 {strides = array<i32>} : memref<2x8x128xf32, #tpu.memory_space<vmem>>, vector<1x8x128xf32>,
    } else {
    }
    %c0_i32_1 = arith.constant 0 : i32
    %3 = arith.cmpi eq, %arg2, %c0_i32_1 : i32
    %4 = arith.extui %3 : i1 to i32
    %c0_i32_2 = arith.constant 0 : i32
    %5 = arith.cmpi ne, %4, %c0_i32_2 : i32
    scf.if %5 {
      %c0_53 = arith.constant 0 : index
      %c0_54 = arith.constant 0 : index
      %c0_55 = arith.constant 0 : index
      %151 = vector.load %arg3[%c0_53, %c0_54, %c0_55] : memref<4x8x128xbf16, #tpu.memory_space<vmem>>, vector<4x8x128xbf16>
      %c0_56 = arith.constant 0 : index
      %c0_57 = arith.constant 0 : index
      %c0_58 = arith.constant 0 : index
      %152 = vector.load %arg11[%c0_56, %c0_57, %c0_58] : memref<4x8x128xbf16, #tpu.memory_space<vmem>>, vector<4x8x128xbf16>
      tpu.vector_store %arg11[%c0_56, %c0_57, %c0_58], %151 {strides = array<i32>} : memref<4x8x128xbf16, #tpu.memory_space<vmem>>, vector<4x8x128xbf16>,
    } else {
    }
    %c0 = arith.constant 0 : index
    %c0_3 = arith.constant 0 : index
    %c0_4 = arith.constant 0 : index
    %6 = vector.load %arg11[%c0, %c0_3, %c0_4] : memref<4x8x128xbf16, #tpu.memory_space<vmem>>, vector<4x8x128xbf16>
    %7 = vector.shape_cast %6 : vector<4x8x128xbf16> to vector<32x128xbf16>
    %c0_5 = arith.constant 0 : index
    %c0_6 = arith.constant 0 : index
    %c0_7 = arith.constant 0 : index
    %8 = vector.load %arg4[%c0_5, %c0_6, %c0_7] : memref<1x128x512xbf16, #tpu.memory_space<vmem>>, vector<1x128x512xbf16>
    %9 = vector.shape_cast %8 : vector<1x128x512xbf16> to vector<128x512xbf16>
    %cst = arith.constant dense<0.000000e+00> : vector<32x512xf32>
    %10 = tpu.matmul %7, %9, %cst {dimension_numbers = #tpu.dot_dimension_numbers<[1], [0], [0], [1], [0, 0, 1, 1], [], []>} : vector<32x128xbf16>, vector<128x512xbf16>, vector<32x512xf32> -> vector<32x512xf32>
    %c0_8 = arith.constant 0 : index
    %c0_9 = arith.constant 0 : index
    %c0_10 = arith.constant 0 : index
    %11 = vector.load %arg6[%c0_8, %c0_9, %c0_10] : memref<1x1x512xf32, #tpu.memory_space<vmem>>, vector<1x1x512xf32>
    %12 = vector.shape_cast %11 : vector<1x1x512xf32> to vector<1x512xf32>
    %13 = vector.broadcast %12 : vector<1x512xf32> to vector<32x512xf32>
    %14 = arith.addf %10, %13 : vector<32x512xf32>
    %15 = vector.shape_cast %14 : vector<32x512xf32> to vector<4x8x512xf32>
    %16 = arith.truncf %15 : vector<4x8x512xf32> to vector<4x8x512xbf16>
    %c0_11 = arith.constant 0 : index
    %c0_12 = arith.constant 0 : index
    %c0_13 = arith.constant 0 : index
    %17 = vector.load %arg10[%c0_11, %c0_12, %c0_13] : memref<4x8x512xbf16, #tpu.memory_space<vmem>>, vector<4x8x512xbf16>
    tpu.vector_store %arg10[%c0_11, %c0_12, %c0_13], %16 {strides = array<i32>} : memref<4x8x512xbf16, #tpu.memory_space<vmem>>, vector<4x8x512xbf16>,
    %c0_14 = arith.constant 0 : index
    %c0_15 = arith.constant 0 : index
    %c0_16 = arith.constant 0 : index
    %18 = vector.load %arg5[%c0_14, %c0_15, %c0_16] : memref<1x128x512xbf16, #tpu.memory_space<vmem>>, vector<1x128x512xbf16>
    %19 = vector.shape_cast %18 : vector<1x128x512xbf16> to vector<128x512xbf16>
    %20 = arith.index_cast %arg2 : i32 to index
    %c0_17 = arith.constant 0 : index
    %c0_18 = arith.constant 0 : index
    %21 = vector.load %arg12[%20, %c0_17, %c0_18] : memref<2x8x128xf32, #tpu.memory_space<vmem>>, vector<1x8x128xf32>
    %22 = vector.shape_cast %21 : vector<1x8x128xf32> to vector<8x128xf32>
    %23 = arith.index_cast %arg2 : i32 to index
    %c0_19 = arith.constant 0 : index
    %c0_20 = arith.constant 0 : index
    %24 = vector.load %arg13[%23, %c0_19, %c0_20] : memref<2x8x128xf32, #tpu.memory_space<vmem>>, vector<1x8x128xf32>
    %25 = vector.shape_cast %24 : vector<1x8x128xf32> to vector<8x128xf32>
    %c0_i32_21 = arith.constant 0 : i32
    %26 = arith.index_cast %c0_i32_21 : i32 to index
    %c0_22 = arith.constant 0 : index
    %c0_23 = arith.constant 0 : index
    %27 = vector.load %arg10[%26, %c0_22, %c0_23] : memref<4x8x512xbf16, #tpu.memory_space<vmem>>, vector<1x8x512xbf16>
    %28 = vector.shape_cast %27 : vector<1x8x512xbf16> to vector<8x512xbf16>
    %29 = arith.extf %28 : vector<8x512xbf16> to vector<8x512xf32>
    %30 = arith.truncf %22 : vector<8x128xf32> to vector<8x128xbf16>
    %cst_24 = arith.constant dense<0.000000e+00> : vector<8x512xf32>
    %31 = tpu.matmul %30, %19, %cst_24 {dimension_numbers = #tpu.dot_dimension_numbers<[1], [0], [0], [1], [0, 0, 1, 1], [], []>} : vector<8x128xbf16>, vector<128x512xbf16>, vector<8x512xf32> -> vector<8x512xf32>
    %32 = arith.addf %29, %31 : vector<8x512xf32>
    %33 = vector.extract_strided_slice %32 {offsets = [0, 0], sizes = [8, 384], strides = [1, 1]} : vector<8x512xf32> to vector<8x384xf32>
    %34 = arith.negf %33 : vector<8x384xf32>
    %35 = math.exp %34 : vector<8x384xf32>
    %cst_25 = arith.constant 1.000000e+00 : f32
    %36 = vector.broadcast %cst_25 : f32 to vector<8x384xf32>
    %37 = arith.addf %36, %35 : vector<8x384xf32>
    %38 = arith.divf %36, %37 : vector<8x384xf32>
    %39 = vector.extract_strided_slice %32 {offsets = [0, 384], sizes = [8, 128], strides = [1, 1]} : vector<8x512xf32> to vector<8x128xf32>
    %40 = math.tanh %39 : vector<8x128xf32>
    %41 = vector.extract_strided_slice %38 {offsets = [0, 0], sizes = [8, 128], strides = [1, 1]} : vector<8x384xf32> to vector<8x128xf32>
    %42 = vector.extract_strided_slice %38 {offsets = [0, 128], sizes = [8, 128], strides = [1, 1]} : vector<8x384xf32> to vector<8x128xf32>
    %43 = vector.extract_strided_slice %38 {offsets = [0, 256], sizes = [8, 128], strides = [1, 1]} : vector<8x384xf32> to vector<8x128xf32>
    %44 = arith.mulf %42, %25 : vector<8x128xf32>
    %45 = arith.mulf %41, %40 : vector<8x128xf32>
    %46 = arith.addf %44, %45 : vector<8x128xf32>
    %47 = math.tanh %46 : vector<8x128xf32>
    %48 = arith.mulf %43, %47 : vector<8x128xf32>
    %49 = arith.truncf %48 : vector<8x128xf32> to vector<8x128xbf16>
    %50 = arith.index_cast %c0_i32_21 : i32 to index
    %c0_26 = arith.constant 0 : index
    %c0_27 = arith.constant 0 : index
    %51 = vector.load %arg11[%50, %c0_26, %c0_27] : memref<4x8x128xbf16, #tpu.memory_space<vmem>>, vector<1x8x128xbf16>
    %52 = vector.shape_cast %51 : vector<1x8x128xbf16> to vector<8x128xbf16>
    %53 = vector.shape_cast %49 : vector<8x128xbf16> to vector<1x8x128xbf16>
    tpu.vector_store %arg11[%50, %c0_26, %c0_27], %53 {strides = array<i32>} : memref<4x8x128xbf16, #tpu.memory_space<vmem>>, vector<1x8x128xbf16>,
    %c1_i32 = arith.constant 1 : i32
    %54 = arith.index_cast %c1_i32 : i32 to index
    %c0_28 = arith.constant 0 : index
    %c0_29 = arith.constant 0 : index
    %55 = vector.load %arg10[%54, %c0_28, %c0_29] : memref<4x8x512xbf16, #tpu.memory_space<vmem>>, vector<1x8x512xbf16>
    %56 = vector.shape_cast %55 : vector<1x8x512xbf16> to vector<8x512xbf16>
    %57 = arith.extf %56 : vector<8x512xbf16> to vector<8x512xf32>
    %58 = arith.truncf %48 : vector<8x128xf32> to vector<8x128xbf16>
    %cst_30 = arith.constant dense<0.000000e+00> : vector<8x512xf32>
    %59 = tpu.matmul %58, %19, %cst_30 {dimension_numbers = #tpu.dot_dimension_numbers<[1], [0], [0], [1], [0, 0, 1, 1], [], []>} : vector<8x128xbf16>, vector<128x512xbf16>, vector<8x512xf32> -> vector<8x512xf32>
    %60 = arith.addf %57, %59 : vector<8x512xf32>
    %61 = vector.extract_strided_slice %60 {offsets = [0, 0], sizes = [8, 384], strides = [1, 1]} : vector<8x512xf32> to vector<8x384xf32>
    %62 = arith.negf %61 : vector<8x384xf32>
    %63 = math.exp %62 : vector<8x384xf32>
    %cst_31 = arith.constant 1.000000e+00 : f32
    %64 = vector.broadcast %cst_31 : f32 to vector<8x384xf32>
    %65 = arith.addf %64, %63 : vector<8x384xf32>
    %66 = arith.divf %64, %65 : vector<8x384xf32>
    %67 = vector.extract_strided_slice %60 {offsets = [0, 384], sizes = [8, 128], strides = [1, 1]} : vector<8x512xf32> to vector<8x128xf32>
    %68 = math.tanh %67 : vector<8x128xf32>
    %69 = vector.extract_strided_slice %66 {offsets = [0, 0], sizes = [8, 128], strides = [1, 1]} : vector<8x384xf32> to vector<8x128xf32>
    %70 = vector.extract_strided_slice %66 {offsets = [0, 128], sizes = [8, 128], strides = [1, 1]} : vector<8x384xf32> to vector<8x128xf32>
    %71 = vector.extract_strided_slice %66 {offsets = [0, 256], sizes = [8, 128], strides = [1, 1]} : vector<8x384xf32> to vector<8x128xf32>
    %72 = arith.mulf %70, %46 : vector<8x128xf32>
    %73 = arith.mulf %69, %68 : vector<8x128xf32>
    %74 = arith.addf %72, %73 : vector<8x128xf32>
    %75 = math.tanh %74 : vector<8x128xf32>
    %76 = arith.mulf %71, %75 : vector<8x128xf32>
    %77 = arith.truncf %76 : vector<8x128xf32> to vector<8x128xbf16>
    %78 = arith.index_cast %c1_i32 : i32 to index
    %c0_32 = arith.constant 0 : index
    %c0_33 = arith.constant 0 : index
    %79 = vector.load %arg11[%78, %c0_32, %c0_33] : memref<4x8x128xbf16, #tpu.memory_space<vmem>>, vector<1x8x128xbf16>
    %80 = vector.shape_cast %79 : vector<1x8x128xbf16> to vector<8x128xbf16>
    %81 = vector.shape_cast %77 : vector<8x128xbf16> to vector<1x8x128xbf16>
    tpu.vector_store %arg11[%78, %c0_32, %c0_33], %81 {strides = array<i32>} : memref<4x8x128xbf16, #tpu.memory_space<vmem>>, vector<1x8x128xbf16>,
    %c2_i32 = arith.constant 2 : i32
    %82 = arith.index_cast %c2_i32 : i32 to index
    %c0_34 = arith.constant 0 : index
    %c0_35 = arith.constant 0 : index
    %83 = vector.load %arg10[%82, %c0_34, %c0_35] : memref<4x8x512xbf16, #tpu.memory_space<vmem>>, vector<1x8x512xbf16>
    %84 = vector.shape_cast %83 : vector<1x8x512xbf16> to vector<8x512xbf16>
    %85 = arith.extf %84 : vector<8x512xbf16> to vector<8x512xf32>
    %86 = arith.truncf %76 : vector<8x128xf32> to vector<8x128xbf16>
    %cst_36 = arith.constant dense<0.000000e+00> : vector<8x512xf32>
    %87 = tpu.matmul %86, %19, %cst_36 {dimension_numbers = #tpu.dot_dimension_numbers<[1], [0], [0], [1], [0, 0, 1, 1], [], []>} : vector<8x128xbf16>, vector<128x512xbf16>, vector<8x512xf32> -> vector<8x512xf32>
    %88 = arith.addf %85, %87 : vector<8x512xf32>
    %89 = vector.extract_strided_slice %88 {offsets = [0, 0], sizes = [8, 384], strides = [1, 1]} : vector<8x512xf32> to vector<8x384xf32>
    %90 = arith.negf %89 : vector<8x384xf32>
    %91 = math.exp %90 : vector<8x384xf32>
    %cst_37 = arith.constant 1.000000e+00 : f32
    %92 = vector.broadcast %cst_37 : f32 to vector<8x384xf32>
    %93 = arith.addf %92, %91 : vector<8x384xf32>
    %94 = arith.divf %92, %93 : vector<8x384xf32>
    %95 = vector.extract_strided_slice %88 {offsets = [0, 384], sizes = [8, 128], strides = [1, 1]} : vector<8x512xf32> to vector<8x128xf32>
    %96 = math.tanh %95 : vector<8x128xf32>
    %97 = vector.extract_strided_slice %94 {offsets = [0, 0], sizes = [8, 128], strides = [1, 1]} : vector<8x384xf32> to vector<8x128xf32>
    %98 = vector.extract_strided_slice %94 {offsets = [0, 128], sizes = [8, 128], strides = [1, 1]} : vector<8x384xf32> to vector<8x128xf32>
    %99 = vector.extract_strided_slice %94 {offsets = [0, 256], sizes = [8, 128], strides = [1, 1]} : vector<8x384xf32> to vector<8x128xf32>
    %100 = arith.mulf %98, %74 : vector<8x128xf32>
    %101 = arith.mulf %97, %96 : vector<8x128xf32>
    %102 = arith.addf %100, %101 : vector<8x128xf32>
    %103 = math.tanh %102 : vector<8x128xf32>
    %104 = arith.mulf %99, %103 : vector<8x128xf32>
    %105 = arith.truncf %104 : vector<8x128xf32> to vector<8x128xbf16>
    %106 = arith.index_cast %c2_i32 : i32 to index
    %c0_38 = arith.constant 0 : index
    %c0_39 = arith.constant 0 : index
    %107 = vector.load %arg11[%106, %c0_38, %c0_39] : memref<4x8x128xbf16, #tpu.memory_space<vmem>>, vector<1x8x128xbf16>
    %108 = vector.shape_cast %107 : vector<1x8x128xbf16> to vector<8x128xbf16>
    %109 = vector.shape_cast %105 : vector<8x128xbf16> to vector<1x8x128xbf16>
    tpu.vector_store %arg11[%106, %c0_38, %c0_39], %109 {strides = array<i32>} : memref<4x8x128xbf16, #tpu.memory_space<vmem>>, vector<1x8x128xbf16>,
    %c3_i32 = arith.constant 3 : i32
    %110 = arith.index_cast %c3_i32 : i32 to index
    %c0_40 = arith.constant 0 : index
    %c0_41 = arith.constant 0 : index
    %111 = vector.load %arg10[%110, %c0_40, %c0_41] : memref<4x8x512xbf16, #tpu.memory_space<vmem>>, vector<1x8x512xbf16>
    %112 = vector.shape_cast %111 : vector<1x8x512xbf16> to vector<8x512xbf16>
    %113 = arith.extf %112 : vector<8x512xbf16> to vector<8x512xf32>
    %114 = arith.truncf %104 : vector<8x128xf32> to vector<8x128xbf16>
    %cst_42 = arith.constant dense<0.000000e+00> : vector<8x512xf32>
    %115 = tpu.matmul %114, %19, %cst_42 {dimension_numbers = #tpu.dot_dimension_numbers<[1], [0], [0], [1], [0, 0, 1, 1], [], []>} : vector<8x128xbf16>, vector<128x512xbf16>, vector<8x512xf32> -> vector<8x512xf32>
    %116 = arith.addf %113, %115 : vector<8x512xf32>
    %117 = vector.extract_strided_slice %116 {offsets = [0, 0], sizes = [8, 384], strides = [1, 1]} : vector<8x512xf32> to vector<8x384xf32>
    %118 = arith.negf %117 : vector<8x384xf32>
    %119 = math.exp %118 : vector<8x384xf32>
    %cst_43 = arith.constant 1.000000e+00 : f32
    %120 = vector.broadcast %cst_43 : f32 to vector<8x384xf32>
    %121 = arith.addf %120, %119 : vector<8x384xf32>
    %122 = arith.divf %120, %121 : vector<8x384xf32>
    %123 = vector.extract_strided_slice %116 {offsets = [0, 384], sizes = [8, 128], strides = [1, 1]} : vector<8x512xf32> to vector<8x128xf32>
    %124 = math.tanh %123 : vector<8x128xf32>
    %125 = vector.extract_strided_slice %122 {offsets = [0, 0], sizes = [8, 128], strides = [1, 1]} : vector<8x384xf32> to vector<8x128xf32>
    %126 = vector.extract_strided_slice %122 {offsets = [0, 128], sizes = [8, 128], strides = [1, 1]} : vector<8x384xf32> to vector<8x128xf32>
    %127 = vector.extract_strided_slice %122 {offsets = [0, 256], sizes = [8, 128], strides = [1, 1]} : vector<8x384xf32> to vector<8x128xf32>
    %128 = arith.mulf %126, %102 : vector<8x128xf32>
    %129 = arith.mulf %125, %124 : vector<8x128xf32>
    %130 = arith.addf %128, %129 : vector<8x128xf32>
    %131 = math.tanh %130 : vector<8x128xf32>
    %132 = arith.mulf %127, %131 : vector<8x128xf32>
    %133 = arith.truncf %132 : vector<8x128xf32> to vector<8x128xbf16>
    %134 = arith.index_cast %c3_i32 : i32 to index
    %c0_44 = arith.constant 0 : index
    %c0_45 = arith.constant 0 : index
    %135 = vector.load %arg11[%134, %c0_44, %c0_45] : memref<4x8x128xbf16, #tpu.memory_space<vmem>>, vector<1x8x128xbf16>
    %136 = vector.shape_cast %135 : vector<1x8x128xbf16> to vector<8x128xbf16>
    %137 = vector.shape_cast %133 : vector<8x128xbf16> to vector<1x8x128xbf16>
    tpu.vector_store %arg11[%134, %c0_44, %c0_45], %137 {strides = array<i32>} : memref<4x8x128xbf16, #tpu.memory_space<vmem>>, vector<1x8x128xbf16>,
    %c4_i32 = arith.constant 4 : i32
    %138 = arith.index_cast %arg2 : i32 to index
    %c0_46 = arith.constant 0 : index
    %c0_47 = arith.constant 0 : index
    %139 = vector.load %arg12[%138, %c0_46, %c0_47] : memref<2x8x128xf32, #tpu.memory_space<vmem>>, vector<1x8x128xf32>
    %140 = vector.shape_cast %139 : vector<1x8x128xf32> to vector<8x128xf32>
    %141 = vector.shape_cast %132 : vector<8x128xf32> to vector<1x8x128xf32>
    tpu.vector_store %arg12[%138, %c0_46, %c0_47], %141 {strides = array<i32>} : memref<2x8x128xf32, #tpu.memory_space<vmem>>, vector<1x8x128xf32>,
    %142 = arith.index_cast %arg2 : i32 to index
    %c0_48 = arith.constant 0 : index
    %c0_49 = arith.constant 0 : index
    %143 = vector.load %arg13[%142, %c0_48, %c0_49] : memref<2x8x128xf32, #tpu.memory_space<vmem>>, vector<1x8x128xf32>
    %144 = vector.shape_cast %143 : vector<1x8x128xf32> to vector<8x128xf32>
    %145 = vector.shape_cast %130 : vector<8x128xf32> to vector<1x8x128xf32>
    tpu.vector_store %arg13[%142, %c0_48, %c0_49], %145 {strides = array<i32>} : memref<2x8x128xf32, #tpu.memory_space<vmem>>, vector<1x8x128xf32>,
    %c1_i32_50 = arith.constant 1 : i32
    %146 = arith.cmpi eq, %arg1, %c1_i32_50 : i32
    %c1_i32_51 = arith.constant 1 : i32
    %147 = arith.cmpi eq, %arg2, %c1_i32_51 : i32
    %148 = arith.andi %146, %147 : i1
    %149 = arith.extui %148 : i1 to i32
    %c0_i32_52 = arith.constant 0 : i32
    %150 = arith.cmpi ne, %149, %c0_i32_52 : i32
    scf.if %150 {
      %151 = arith.truncf %132 : vector<8x128xf32> to vector<8x128xbf16>
      %c0_53 = arith.constant 0 : index
      %c0_54 = arith.constant 0 : index
      %152 = vector.load %arg7[%c0_53, %c0_54] : memref<128x128xbf16, #tpu.memory_space<vmem>>, vector<128x128xbf16>
      %cst_55 = arith.constant dense<0.000000e+00> : vector<8x128xf32>
      %153 = tpu.matmul %151, %152, %cst_55 {dimension_numbers = #tpu.dot_dimension_numbers<[1], [0], [0], [1], [0, 0, 1, 1], [], []>} : vector<8x128xbf16>, vector<128x128xbf16>, vector<8x128xf32> -> vector<8x128xf32>
      %c0_56 = arith.constant 0 : index
      %c0_57 = arith.constant 0 : index
      %154 = vector.load %arg8[%c0_56, %c0_57] : memref<1x128xf32, #tpu.memory_space<vmem>>, vector<1x128xf32>
      %155 = vector.broadcast %154 : vector<1x128xf32> to vector<8x128xf32>
      %156 = arith.addf %153, %155 : vector<8x128xf32>
      %c0_58 = arith.constant 0 : index
      %c0_59 = arith.constant 0 : index
      %157 = vector.load %arg9[%c0_58, %c0_59] : memref<8x128xf32, #tpu.memory_space<vmem>>, vector<8x128xf32>
      tpu.vector_store %arg9[%c0_58, %c0_59], %156 {strides = array<i32>} : memref<8x128xf32, #tpu.memory_space<vmem>>, vector<8x128xf32>,
    } else {
    }
    return
  }
  func.func @transform_0(%arg0: i32, %arg1: i32, %arg2: i32) -> (i32, i32, i32) {
    %c0_i32 = arith.constant 0 : i32
    %c0_i32_0 = arith.constant 0 : i32
    return %arg1, %arg0, %c0_i32 : i32, i32, i32
  }
  func.func @transform_1(%arg0: i32, %arg1: i32, %arg2: i32) -> (i32, i32, i32) {
    %c0_i32 = arith.constant 0 : i32
    %c0_i32_0 = arith.constant 0 : i32
    %c0_i32_1 = arith.constant 0 : i32
    return %arg2, %c0_i32, %c0_i32_0 : i32, i32, i32
  }
  func.func @transform_2(%arg0: i32, %arg1: i32, %arg2: i32) -> (i32, i32, i32) {
    %c0_i32 = arith.constant 0 : i32
    %c0_i32_0 = arith.constant 0 : i32
    %c0_i32_1 = arith.constant 0 : i32
    return %arg2, %c0_i32, %c0_i32_0 : i32, i32, i32
  }
  func.func @transform_3(%arg0: i32, %arg1: i32, %arg2: i32) -> (i32, i32, i32) {
    %c0_i32 = arith.constant 0 : i32
    %c0_i32_0 = arith.constant 0 : i32
    %c0_i32_1 = arith.constant 0 : i32
    return %arg2, %c0_i32, %c0_i32_0 : i32, i32, i32
  }
  func.func @transform_4(%arg0: i32, %arg1: i32, %arg2: i32) -> (i32, i32) {
    %c0_i32 = arith.constant 0 : i32
    %c0_i32_0 = arith.constant 0 : i32
    %c0_i32_1 = arith.constant 0 : i32
    return %c0_i32, %c0_i32_0 : i32, i32
  }
  func.func @transform_5(%arg0: i32, %arg1: i32, %arg2: i32) -> (i32, i32) {
    %c0_i32 = arith.constant 0 : i32
    %c0_i32_0 = arith.constant 0 : i32
    %c0_i32_1 = arith.constant 0 : i32
    return %c0_i32, %c0_i32_0 : i32, i32
  }
  func.func @transform_6(%arg0: i32, %arg1: i32, %arg2: i32) -> (i32, i32) {
    %c0_i32 = arith.constant 0 : i32
    %c0_i32_0 = arith.constant 0 : i32
    return %arg0, %c0_i32 : i32, i32
  }
}

</mosaic_0001>

<llo_original>
// kernel: lstm_forward.1
$region0: #{lstm_forward.1}
  #allocation0 [shape = 'u32[]', space=smem, size = 0x4, offset = 0x4, fixed_abs, tag = 'smem constant byte address 0x4 - core index']
  #allocation1 [shape = 'u32[144,128]{1,0:T(1,128)}', space=vmem, size = 0x12000, scoped, tag = 'internal scratch']
  #allocation2 [shape = 'bf16[4,8,512]{2,1,0:T(8,128)(2,1)}', space=vmem, size = 0x8000, scoped, tag = 'scratch operand']
  #allocation3 [shape = 'bf16[4,8,128]{2,1,0:T(8,128)(2,1)}', space=vmem, size = 0x2000, scoped, tag = 'scratch operand']
  #allocation4 [shape = 'f32[2,8,128]{2,1,0:T(8,128)}', space=vmem, size = 0x2000, scoped, tag = 'scratch operand']
  #allocation5 [shape = 'f32[2,8,128]{2,1,0:T(8,128)}', space=vmem, size = 0x2000, scoped, tag = 'scratch operand']
  %s0 = inlined_call_operand.vmem [shape: bf16[8,8,128], index: 0, kind: input, shape index: {}]
  %s1 = inlined_call_operand.hbm [shape: bf16[2,128,512], index: 1, kind: input, shape index: {}]
  %s2 = inlined_call_operand.hbm [shape: bf16[2,128,512], index: 2, kind: input, shape index: {}]
  %s3 = inlined_call_operand.vmem [shape: f32[2,1,512], index: 3, kind: input, shape index: {}]
  %s4 = inlined_call_operand.vmem [shape: bf16[128,128], index: 4, kind: input, shape index: {}]
  %s5 = inlined_call_operand.vmem [shape: f32[1,128], index: 5, kind: input, shape index: {}]
  %s6 = inlined_call_operand.vmem [shape: f32[8,128], index: 6, kind: output, shape index: {}]
  %s7 = sld [smem:[#allocation0]]
  $region77: #{lstm_forward.1} parent=0
    _
  %s9 = ssub.s32 1, %s7
  %s10 = scalar_select 0, %s9, %s7
  $region1: #{lstm_forward.1} parent=0
    #allocation6 [shape = 'u8[262144]{0}', space=vmem, size = 0x40000, scoped, tag = 'input window, operand 1']
    #allocation7 [shape = 's32[2]{0}', space=sflag, size = 0x8, scoped, tag = 'scoped memory for lstm_forward.1']
    #allocation8 [shape = 'u8[262144]{0}', space=vmem, size = 0x40000, scoped, tag = 'input window, operand 2']
    #allocation9 [shape = 's32[2]{0}', space=sflag, size = 0x8, scoped, tag = 'scoped memory for lstm_forward.1']
    %11 = vsyncpa [#allocation7], 0
    %s12 = scalar_lea.sflag [#allocation7], 1
    %13 = vsyncpa %s12, 0
    %14 = vsyncpa [#allocation9], 0
    %s15 = scalar_lea.sflag [#allocation9], 1
    %16 = vsyncpa %s15, 0
    loop: start=0, step=1, limit=6
    $region2: #{lstm_forward.1} parent=1 // loop_pre_header
      _
    $region3: #{lstm_forward.1} parent=1 // loop_header
      %s18 = sphi 0, %s22
      %p19 = scmp.ge.s32.totalorder %s18, 6
      %s25 = sphi 0, %s44
      %s26 = sphi 0, %s40
      %s27 = sphi 0, %s36
      %s28 = sphi 0, %s25
      %s29 = sphi 0, %s26
      %s30 = sphi 0, %s27
      %s31 = sphi 0, %s28
      %s32 = sphi 0, %s29
      %s33 = sphi 0, %s30
      %s49 = sphi 0, %s51
      %s52 = sphi 0, %s49
      %s53 = sphi 0, %s52
      %s69 = sphi 0, %s53
      %s75 = sphi 0, %s77
      %s78 = sphi 0, %s75
      %s79 = sphi 0, %s78
      %s95 = sphi 0, %s79
      %s101 = sphi 0, %s103
      %s104 = sphi 0, %s101
      %s105 = sphi 0, %s104
      %s121 = sphi 0, %s105
      %s127 = sphi 0, %s129
      %s130 = sphi 0, %s127
      %s131 = sphi 0, %s130
      %s147 = sphi 0, %s131
      %s151 = sphi 0, %s151
      %s153 = sphi 0, %s151
      %s154 = sphi 0, %s153
      %s168 = sphi 0, %s154
      %s172 = sphi 0, %s172
      %s174 = sphi 0, %s172
      %s175 = sphi 0, %s174
      %s189 = sphi 0, %s175
      %s195 = sphi 0, %s197
      %s198 = sphi 0, %s195
      %s199 = sphi 0, %s198
      %s215 = sphi 0, %s199
    $region4: #{lstm_forward.1} parent=1 // loop_header_branch
      %21 = sbr.rel (%p19) target = $region8
    $region5: #{lstm_forward.1} parent=1 // loop_body
      %s23 = ssub.s32 %s18, 1
      %s24 = ssub.s32 %s18, 2
      %s34 = sadd.s32 1, %s27
      %p35 = scmp.ge.s32.totalorder %s34, 2
      %s36 = scalar_select %p35, 0, %s34
      %s37 = sadd.s32 1, %s26
      %s38 = scalar_select %p35, %s37, %s26
      %p39 = scmp.ge.s32.totalorder %s38, 2
      %s40 = scalar_select %p39, 0, %s38
      %s41 = sadd.s32 1, %s25
      %s42 = scalar_select %p39, %s41, %s25
      %p43 = scmp.ge.s32.totalorder %s42, 1
      %s44 = scalar_select %p43, 0, %s42
      %s45 = ssub.s32 %s26, %s40
      %s46 = ssub.s32 %s25, %s44
      %s47 = sor.u32 %s45, %s46
      %p48 = scmp.eq.s32.totalorder %s47, 0
      %s50 = sadd.s32 %s49, 1
      %s51 = scalar_select %p48, %s49, %s50
      %p54 = pneg %p48
      %p55 = scmp.eq.s32.totalorder %s18, 3
      %p56 = por %p54, %p55
      %p57 = scmp.ne.s32.totalorder %s49, %s52
      %p58 = scmp.eq.s32.totalorder %s18, 0
      %p59 = por %p57, %p58
      %p60 = scmp.ne.s32.totalorder %s49, %s52
      %p61 = scmp.eq.s32.totalorder %s23, 3
      %p62 = por %p60, %p61
      %p63 = scmp.ne.s32.totalorder %s52, %s53
      %p64 = scmp.eq.s32.totalorder %s23, 0
      %p65 = por %p63, %p64
      %p66 = scmp.ne.s32.totalorder %s52, %s53
      %p67 = scmp.eq.s32.totalorder %s24, 3
      %p68 = por %p66, %p67
      %p70 = scmp.ne.s32.totalorder %s53, %s69
      %p71 = scmp.eq.s32.totalorder %s24, 0
      %p72 = por %p70, %p71
      %s73 = ssub.s32 %s27, %s36
      %p74 = scmp.eq.s32.totalorder %s73, 0
      %s76 = sadd.s32 %s75, 1
      %s77 = scalar_select %p74, %s75, %s76
      %p80 = pneg %p74
      %p81 = scmp.eq.s32.totalorder %s18, 3
      %p82 = por %p80, %p81
      %p83 = scmp.ne.s32.totalorder %s75, %s78
      %p84 = scmp.eq.s32.totalorder %s18, 0
      %p85 = por %p83, %p84
      %p86 = scmp.ne.s32.totalorder %s75, %s78
      %p87 = scmp.eq.s32.totalorder %s23, 3
      %p88 = por %p86, %p87
      %p89 = scmp.ne.s32.totalorder %s78, %s79
      %p90 = scmp.eq.s32.totalorder %s23, 0
      %p91 = por %p89, %p90
      %p92 = scmp.ne.s32.totalorder %s78, %s79
      %p93 = scmp.eq.s32.totalorder %s24, 3
      %p94 = por %p92, %p93
      %p96 = scmp.ne.s32.totalorder %s79, %s95
      %p97 = scmp.eq.s32.totalorder %s24, 0
      %p98 = por %p96, %p97
      %s99 = ssub.s32 %s27, %s36
      %p100 = scmp.eq.s32.totalorder %s99, 0
      %s102 = sadd.s32 %s101, 1
      %s103 = scalar_select %p100, %s101, %s102
      %p106 = pneg %p100
      %p107 = scmp.eq.s32.totalorder %s18, 3
      %p108 = por %p106, %p107
      %p109 = scmp.ne.s32.totalorder %s101, %s104
      %p110 = scmp.eq.s32.totalorder %s18, 0
      %p111 = por %p109, %p110
      %p112 = scmp.ne.s32.totalorder %s101, %s104
      %p113 = scmp.eq.s32.totalorder %s23, 3
      %p114 = por %p112, %p113
      %p115 = scmp.ne.s32.totalorder %s104, %s105
      %p116 = scmp.eq.s32.totalorder %s23, 0
      %p117 = por %p115, %p116
      %p118 = scmp.ne.s32.totalorder %s104, %s105
      %p119 = scmp.eq.s32.totalorder %s24, 3
      %p120 = por %p118, %p119
      %p122 = scmp.ne.s32.totalorder %s105, %s121
      %p123 = scmp.eq.s32.totalorder %s24, 0
      %p124 = por %p122, %p123
      %s125 = ssub.s32 %s27, %s36
      %p126 = scmp.eq.s32.totalorder %s125, 0
      %s128 = sadd.s32 %s127, 1
      %s129 = scalar_select %p126, %s127, %s128
      %p132 = pneg %p126
      %p133 = scmp.eq.s32.totalorder %s18, 3
      %p134 = por %p132, %p133
      %p135 = scmp.ne.s32.totalorder %s127, %s130
      %p136 = scmp.eq.s32.totalorder %s18, 0
      %p137 = por %p135, %p136
      %p138 = scmp.ne.s32.totalorder %s127, %s130
      %p139 = scmp.eq.s32.totalorder %s23, 3
      %p140 = por %p138, %p139
      %p141 = scmp.ne.s32.totalorder %s130, %s131
      %p142 = scmp.eq.s32.totalorder %s23, 0
      %p143 = por %p141, %p142
      %p144 = scmp.ne.s32.totalorder %s130, %s131
      %p145 = scmp.eq.s32.totalorder %s24, 3
      %p146 = por %p144, %p145
      %p148 = scmp.ne.s32.totalorder %s131, %s147
      %p149 = scmp.eq.s32.totalorder %s24, 0
      %p150 = por %p148, %p149
      %s152 = sadd.s32 %s151, 1
      %p155 = scmp.eq.s32.totalorder %s18, 3
      %p156 = scmp.ne.s32.totalorder %s151, %s153
      %p157 = scmp.eq.s32.totalorder %s18, 0
      %p158 = por %p156, %p157
      %p159 = scmp.ne.s32.totalorder %s151, %s153
      %p160 = scmp.eq.s32.totalorder %s23, 3
      %p161 = por %p159, %p160
      %p162 = scmp.ne.s32.totalorder %s153, %s154
      %p163 = scmp.eq.s32.totalorder %s23, 0
      %p164 = por %p162, %p163
      %p165 = scmp.ne.s32.totalorder %s153, %s154
      %p166 = scmp.eq.s32.totalorder %s24, 3
      %p167 = por %p165, %p166
      %p169 = scmp.ne.s32.totalorder %s154, %s168
      %p170 = scmp.eq.s32.totalorder %s24, 0
      %p171 = por %p169, %p170
      %s173 = sadd.s32 %s172, 1
      %p176 = scmp.eq.s32.totalorder %s18, 3
      %p177 = scmp.ne.s32.totalorder %s172, %s174
      %p178 = scmp.eq.s32.totalorder %s18, 0
      %p179 = por %p177, %p178
      %p180 = scmp.ne.s32.totalorder %s172, %s174
      %p181 = scmp.eq.s32.totalorder %s23, 3
      %p182 = por %p180, %p181
      %p183 = scmp.ne.s32.totalorder %s174, %s175
      %p184 = scmp.eq.s32.totalorder %s23, 0
      %p185 = por %p183, %p184
      %p186 = scmp.ne.s32.totalorder %s174, %s175
      %p187 = scmp.eq.s32.totalorder %s24, 3
      %p188 = por %p186, %p187
      %p190 = scmp.ne.s32.totalorder %s175, %s189
      %p191 = scmp.eq.s32.totalorder %s24, 0
      %p192 = por %p190, %p191
      %s193 = ssub.s32 %s25, %s44
      %p194 = scmp.eq.s32.totalorder %s193, 0
      %s196 = sadd.s32 %s195, 1
      %s197 = scalar_select %p194, %s195, %s196
      %p200 = pneg %p194
      %p201 = scmp.eq.s32.totalorder %s18, 3
      %p202 = por %p200, %p201
      %p203 = scmp.ne.s32.totalorder %s195, %s198
      %p204 = scmp.eq.s32.totalorder %s18, 0
      %p205 = por %p203, %p204
      %p206 = scmp.ne.s32.totalorder %s195, %s198
      %p207 = scmp.eq.s32.totalorder %s23, 3
      %p208 = por %p206, %p207
      %p209 = scmp.ne.s32.totalorder %s198, %s199
      %p210 = scmp.eq.s32.totalorder %s23, 0
      %p211 = por %p209, %p210
      %p212 = scmp.ne.s32.totalorder %s198, %s199
      %p213 = scmp.eq.s32.totalorder %s24, 3
      %p214 = por %p212, %p213
      %p216 = scmp.ne.s32.totalorder %s199, %s215
      %p217 = scmp.eq.s32.totalorder %s24, 0
      %p218 = por %p216, %p217
      %p219 = scmp.le.s32.totalorder 1, %s18
      %p220 = scmp.lt.s32.totalorder %s18, 5
      %p221 = pnand %p219, %p220
      %p222 = pneg %p221
      // Predicated region
      $region9: #{lstm_forward.1} parent=5 // pred_check
        _
      $region10: #{lstm_forward.1} parent=5 // pred_check_branch
        %224 = sbr.rel (%p221) target = $region12
      $region11: #{lstm_forward.1} parent=5 // pred_region
        %s225 = ssub.s32 %s18, 1
        // Predicated region
        $region13: #{lstm_forward.1} parent=11 // pred_check
          %p226 = pneg %p164
        $region14: #{lstm_forward.1} parent=11 // pred_check_branch
          %228 = sbr.rel (%p226) target = $region16
        $region15: #{lstm_forward.1} parent=11 // pred_region
          _
        $region16: #{lstm_forward.1} parent=11 // pred_fallthru
          _
        // Predicated region
        $region17: #{lstm_forward.1} parent=11 // pred_check
          %p229 = pneg %p185
        $region18: #{lstm_forward.1} parent=11 // pred_check_branch
          %231 = sbr.rel (%p229) target = $region20
        $region19: #{lstm_forward.1} parent=11 // pred_region
          _
        $region20: #{lstm_forward.1} parent=11 // pred_fallthru
          _
      $region12: #{lstm_forward.1} parent=5 // pred_fallthru
        _
      %p232 = scmp.lt.s32.totalorder %s18, 4
      // Predicated region
      $region21: #{lstm_forward.1} parent=5 // pred_check
        %p233 = pneg %p232
      $region22: #{lstm_forward.1} parent=5 // pred_check_branch
        %235 = sbr.rel (%p233) target = $region24
      $region23: #{lstm_forward.1} parent=5 // pred_region
        // Predicated region
        $region25: #{lstm_forward.1} parent=23 // pred_check
          %p236 = pneg %p59
        $region26: #{lstm_forward.1} parent=23 // pred_check_branch
          %238 = sbr.rel (%p236) target = $region28
        $region27: #{lstm_forward.1} parent=23 // pred_region
          %s239 = smul.u32 4, %s26
          %p240 = scmp.lt.s32.totalorder %s239, 7
          %s241 = scalar_select %p240, %s239, 7
          %p242 = scmp.lt.s32.totalorder %s25, 0
          %s243 = scalar_select %p242, %s25, 0
          %s244 = sadd.s32 %s243, %s241
          %s245 = smul.addr %s244, 4
          %s246 = scalar_lea.vmem %s0, %s245
          %s247 = smul.u32 4, %s26
        $region28: #{lstm_forward.1} parent=23 // pred_fallthru
          _
        // Predicated region
        $region29: #{lstm_forward.1} parent=23 // pred_check
          %p248 = pneg %p85
        $region30: #{lstm_forward.1} parent=23 // pred_check_branch
          %250 = sbr.rel (%p248) target = $region32
        $region31: #{lstm_forward.1} parent=23 // pred_region
          %s251 = sand.u32 %s75, 1
          %s252 = scalar_lea.sflag [#allocation7], %s251
          %s253 = sand.u32 %s75, 1
          %s254 = smul.addr %s253, 256
          %s255 = scalar_lea.vmem [#allocation6], %s254
          %s257 = ssub.s32 4096, 4096
          %258 = vsyncadd %s252, %s257
          %s259 = smul.addr %s27, 64
          %s260 = smul.addr %s259, 64
          %s261 = scalar_lea.hbm %s1, %s260
          %s262 = sshll.u32 %s255, 4
          %s263 = int_to_ptr.vmem [resolvable:$true] %s262
          %268 = dma.hbm_to_vmem [thread:$0]  %s261, 4096, %s263, %s252, 256, 256, 16
        $region32: #{lstm_forward.1} parent=23 // pred_fallthru
          _
        // Predicated region
        $region33: #{lstm_forward.1} parent=23 // pred_check
          %p269 = pneg %p111
        $region34: #{lstm_forward.1} parent=23 // pred_check_branch
          %271 = sbr.rel (%p269) target = $region36
        $region35: #{lstm_forward.1} parent=23 // pred_region
          %s272 = sand.u32 %s101, 1
          %s273 = scalar_lea.sflag [#allocation9], %s272
          %s274 = sand.u32 %s101, 1
          %s275 = smul.addr %s274, 256
          %s276 = scalar_lea.vmem [#allocation8], %s275
          %s278 = ssub.s32 4096, 4096
          %279 = vsyncadd %s273, %s278
          %s280 = smul.addr %s27, 64
          %s281 = smul.addr %s280, 64
          %s282 = scalar_lea.hbm %s2, %s281
          %s283 = sshll.u32 %s276, 4
          %s284 = int_to_ptr.vmem [resolvable:$true] %s283
          %289 = dma.hbm_to_vmem [thread:$0]  %s282, 4096, %s284, %s273, 256, 256, 16
        $region36: #{lstm_forward.1} parent=23 // pred_fallthru
          _
        // Predicated region
        $region37: #{lstm_forward.1} parent=23 // pred_check
          %p290 = pneg %p137
        $region38: #{lstm_forward.1} parent=23 // pred_check_branch
          %292 = sbr.rel (%p290) target = $region40
        $region39: #{lstm_forward.1} parent=23 // pred_region
          %p293 = scmp.lt.s32.totalorder %s27, 1
          %s294 = scalar_select %p293, %s27, 1
          %s295 = smul.addr %s294, 4
          %s296 = scalar_lea.vmem %s3, %s295
        $region40: #{lstm_forward.1} parent=23 // pred_fallthru
          _
      $region24: #{lstm_forward.1} parent=5 // pred_fallthru
        _
      %p297 = scmp.le.s32.totalorder 1, %s18
      %p298 = scmp.lt.s32.totalorder %s18, 5
      %p299 = pnand %p297, %p298
      %p300 = pneg %p299
      // Predicated region
      $region41: #{lstm_forward.1} parent=5 // pred_check
        _
      $region42: #{lstm_forward.1} parent=5 // pred_check_branch
        %302 = sbr.rel (%p299) target = $region44
      $region43: #{lstm_forward.1} parent=5 // pred_region
        %s303 = ssub.s32 %s18, 1
        %s304 = sand.u32 %s78, 1
        %s305 = scalar_lea.sflag [#allocation7], %s304
        %s306 = sand.u32 %s78, 1
        %s307 = smul.addr %s306, 256
        %s308 = scalar_lea.vmem [#allocation6], %s307
        // Predicated region
        $region45: #{lstm_forward.1} parent=43 // pred_check
          %p309 = pneg %p91
        $region46: #{lstm_forward.1} parent=43 // pred_check_branch
          %311 = sbr.rel (%p309) target = $region48
        $region47: #{lstm_forward.1} parent=43 // pred_region
          %312 = dma.done %s305, 4096
        $region48: #{lstm_forward.1} parent=43 // pred_fallthru
          _
        %s313 = sand.u32 %s104, 1
        %s314 = scalar_lea.sflag [#allocation9], %s313
        %s315 = sand.u32 %s104, 1
        %s316 = smul.addr %s315, 256
        %s317 = scalar_lea.vmem [#allocation8], %s316
        // Predicated region
        $region49: #{lstm_forward.1} parent=43 // pred_check
          %p318 = pneg %p117
        $region50: #{lstm_forward.1} parent=43 // pred_check_branch
          %320 = sbr.rel (%p318) target = $region52
        $region51: #{lstm_forward.1} parent=43 // pred_region
          %321 = dma.done %s314, 4096
        $region52: #{lstm_forward.1} parent=43 // pred_fallthru
          _
        %s322 = smul.u32 4, %s29
        %p323 = scmp.lt.s32.totalorder %s322, 7
        %s324 = scalar_select %p323, %s322, 7
        %p325 = scmp.lt.s32.totalorder %s28, 0
        %s326 = scalar_select %p325, %s28, 0
        %s327 = sadd.s32 %s326, %s324
        %s328 = smul.addr %s327, 4
        %s329 = scalar_lea.vmem %s0, %s328
        %p330 = pneg %p65
        %p331 = pneg %p62
        %s332 = sand.u32 %s78, 1
        %s333 = scalar_lea.sflag [#allocation7], %s332
        %s334 = sand.u32 %s78, 1
        %s335 = smul.addr %s334, 256
        %s336 = scalar_lea.vmem [#allocation6], %s335
        %p337 = pneg %p91
        %p338 = pneg %p88
        %s339 = sand.u32 %s104, 1
        %s340 = scalar_lea.sflag [#allocation9], %s339
        %s341 = sand.u32 %s104, 1
        %s342 = smul.addr %s341, 256
        %s343 = scalar_lea.vmem [#allocation8], %s342
        %p344 = pneg %p117
        %p345 = pneg %p114
        %p346 = scmp.lt.s32.totalorder %s30, 1
        %s347 = scalar_select %p346, %s30, 1
        %s348 = smul.addr %s347, 4
        %s349 = scalar_lea.vmem %s3, %s348
        %p350 = pneg %p143
        %p351 = pneg %p140
        %p352 = pneg %p164
        %p353 = pneg %p161
        %p354 = pneg %p185
        %p355 = pneg %p182
        %p356 = pneg %p211
        %p357 = pneg %p208
        %p358 = scmp.lt.s32.totalorder %s28, 0
        %s359 = scalar_select %p358, %s28, 0
        %s360 = smul.addr %s359, 8
        %s361 = scalar_lea.vmem %s6, %s360
        %s362 = smul.u32 4, %s29
        %p363 = scmp.lt.s32.totalorder %s362, 7
        %s364 = scalar_select %p363, %s362, 7
        %p365 = scmp.lt.s32.totalorder %s28, 0
        %s366 = scalar_select %p365, %s28, 0
        %s367 = sadd.s32 %s366, %s364
        %s368 = smul.addr %s367, 4
        %s369 = scalar_lea.vmem %s0, %s368
        %s370 = smul.u32 4, %s29
        %p371 = scmp.lt.s32.totalorder %s30, 1
        %s372 = scalar_select %p371, %s30, 1
        %s373 = smul.addr %s372, 4
        %s374 = scalar_lea.vmem %s3, %s373
        %p375 = scmp.lt.s32.totalorder %s28, 0
        %s376 = scalar_select %p375, %s28, 0
        %s377 = smul.addr %s376, 8
        %s378 = scalar_lea.vmem %s6, %s377
        %p380 = scmp.eq.s32.totalorder %s29, 0
        // Predicated region
        $region53: #{lstm_forward.1} parent=43 // pred_check
          %p381 = pneg %p380
        $region54: #{lstm_forward.1} parent=43 // pred_check_branch
          %383 = sbr.rel (%p381) target = $region56
        $region55: #{lstm_forward.1} parent=43 // pred_region
          %s384 = smul.u32 %s30, 8
          %s385 = scalar_lea.vmem [#allocation4], %s384
          %386 = vst [vmem:[%s385] sm:$0xff] 0.0
          %s387 = scalar_lea.vmem [#allocation5], %s384
          %388 = vst [vmem:[%s387] sm:$0xff] 0.0
        $region56: #{lstm_forward.1} parent=43 // pred_fallthru
          _
        %p389 = scmp.eq.s32.totalorder %s30, 0
        // Predicated region
        $region57: #{lstm_forward.1} parent=43 // pred_check
          %p390 = pneg %p389
        $region58: #{lstm_forward.1} parent=43 // pred_check_branch
          %392 = sbr.rel (%p390) target = $region60
        $region59: #{lstm_forward.1} parent=43 // pred_region
          %v393 = vld [vmem:[%s369] sm:$0xf]
          %v394 = vld [vmem:[%s369 + $0x4] sm:$0xf]
          %v395 = vld [vmem:[%s369 + $0x8] sm:$0xf]
          %v396 = vld [vmem:[%s369 + $0xc] sm:$0xf]
          %397 = vst [vmem:[#allocation3] sm:$0xf] %v393
          %398 = vst [vmem:[#allocation3 + $0x4] sm:$0xf] %v394
          %399 = vst [vmem:[#allocation3 + $0x8] sm:$0xf] %v395
          %400 = vst [vmem:[#allocation3 + $0xc] sm:$0xf] %v396
        $region60: #{lstm_forward.1} parent=43 // pred_fallthru
          _
        %v401 = vld [vmem:[#allocation3] sm:$0xf]
        %v402 = vld [vmem:[#allocation3 + $0x4] sm:$0xf]
        %v403 = vld [vmem:[#allocation3 + $0x8] sm:$0xf]
        %v404 = vld [vmem:[#allocation3 + $0xc] sm:$0xf]
        %v405 = vld [vmem:[%s308] sm:$0xff]
        %v406 = vld [vmem:[%s308 + $0x8] sm:$0xff]
        %v407 = vld [vmem:[%s308 + $0x10] sm:$0xff]
        %v408 = vld [vmem:[%s308 + $0x18] sm:$0xff]
        %v409 = vld [vmem:[%s308 + $0x20] sm:$0xff]
        %v410 = vld [vmem:[%s308 + $0x28] sm:$0xff]
        %v411 = vld [vmem:[%s308 + $0x30] sm:$0xff]
        %v412 = vld [vmem:[%s308 + $0x38] sm:$0xff]
        %v413 = vld [vmem:[%s308 + $0x40] sm:$0xff]
        %v414 = vld [vmem:[%s308 + $0x48] sm:$0xff]
        %v415 = vld [vmem:[%s308 + $0x50] sm:$0xff]
        %v416 = vld [vmem:[%s308 + $0x58] sm:$0xff]
        %v417 = vld [vmem:[%s308 + $0x60] sm:$0xff]
        %v418 = vld [vmem:[%s308 + $0x68] sm:$0xff]
        %v419 = vld [vmem:[%s308 + $0x70] sm:$0xff]
        %v420 = vld [vmem:[%s308 + $0x78] sm:$0xff]
        %v421 = vld [vmem:[%s308 + $0x80] sm:$0xff]
        %v422 = vld [vmem:[%s308 + $0x88] sm:$0xff]
        %v423 = vld [vmem:[%s308 + $0x90] sm:$0xff]
        %v424 = vld [vmem:[%s308 + $0x98] sm:$0xff]
        %v425 = vld [vmem:[%s308 + $0xa0] sm:$0xff]
        %v426 = vld [vmem:[%s308 + $0xa8] sm:$0xff]
        %v427 = vld [vmem:[%s308 + $0xb0] sm:$0xff]
        %v428 = vld [vmem:[%s308 + $0xb8] sm:$0xff]
        %v429 = vld [vmem:[%s308 + $0xc0] sm:$0xff]
        %v430 = vld [vmem:[%s308 + $0xc8] sm:$0xff]
        %v431 = vld [vmem:[%s308 + $0xd0] sm:$0xff]
        %v432 = vld [vmem:[%s308 + $0xd8] sm:$0xff]
        %v433 = vld [vmem:[%s308 + $0xe0] sm:$0xff]
        %v434 = vld [vmem:[%s308 + $0xe8] sm:$0xff]
        %v435 = vld [vmem:[%s308 + $0xf0] sm:$0xff]
        %v436 = vld [vmem:[%s308 + $0xf8] sm:$0xff]
        %v437 = vld [vmem:[%s374] sm:$0xf]
        %v439 = vlaneseq
        %v440 = vshrl.u32 %v439, 7
        %v441 = vsub.s32 0, %v440
        %v442 = vrot.slane %v437, %v441
        %v443 = vlaneseq
        %v444 = vshrl.u32 %v443, 7
        %v445 = vsub.s32 1, %v444
        %v446 = vrot.slane %v437, %v445
        %v447 = vlaneseq
        %v448 = vshrl.u32 %v447, 7
        %v449 = vsub.s32 2, %v448
        %v450 = vrot.slane %v437, %v449
        %v451 = vlaneseq
        %v452 = vshrl.u32 %v451, 7
        %v453 = vsub.s32 3, %v452
        %v454 = vrot.slane %v437, %v453
        %v463 = vunpack.c.l.b16 %v401
        %v464 = vunpack.c.l.b16 %v402
        %v465 = vunpack.c.l.b16 %v403
        %v466 = vunpack.c.l.b16 %v404
        %v467 = vpack.c.b16 %v464, %v463
        %v468 = vpack.c.b16 %v466, %v465
        %v503 = vunpack.c.l.b16 %v405
        %v504 = vunpack.c.h.b16 %v405
        %v505 = vunpack.c.l.b16 %v406
        %v506 = vunpack.c.h.b16 %v406
        %v507 = vunpack.c.l.b16 %v407
        %v508 = vunpack.c.h.b16 %v407
        %v509 = vunpack.c.l.b16 %v408
        %v510 = vunpack.c.h.b16 %v408
        %v511 = vunpack.c.l.b16 %v409
        %v512 = vunpack.c.h.b16 %v409
        %v513 = vunpack.c.l.b16 %v410
        %v514 = vunpack.c.h.b16 %v410
        %v515 = vunpack.c.l.b16 %v411
        %v516 = vunpack.c.h.b16 %v411
        %v517 = vunpack.c.l.b16 %v412
        %v518 = vunpack.c.h.b16 %v412
        %v519 = vunpack.c.l.b16 %v413
        %v520 = vunpack.c.h.b16 %v413
        %v521 = vunpack.c.l.b16 %v414
        %v522 = vunpack.c.h.b16 %v414
        %v523 = vunpack.c.l.b16 %v415
        %v524 = vunpack.c.h.b16 %v415
        %v525 = vunpack.c.l.b16 %v416
        %v526 = vunpack.c.h.b16 %v416
        %v527 = vunpack.c.l.b16 %v417
        %v528 = vunpack.c.h.b16 %v417
        %v529 = vunpack.c.l.b16 %v418
        %v530 = vunpack.c.h.b16 %v418
        %v531 = vunpack.c.l.b16 %v419
        %v532 = vunpack.c.h.b16 %v419
        %v533 = vunpack.c.l.b16 %v420
        %v534 = vunpack.c.h.b16 %v420
        %v535 = vunpack.c.l.b16 %v421
        %v536 = vunpack.c.h.b16 %v421
        %v537 = vunpack.c.l.b16 %v422
        %v538 = vunpack.c.h.b16 %v422
        %v539 = vunpack.c.l.b16 %v423
        %v540 = vunpack.c.h.b16 %v423
        %v541 = vunpack.c.l.b16 %v424
        %v542 = vunpack.c.h.b16 %v424
        %v543 = vunpack.c.l.b16 %v425
        %v544 = vunpack.c.h.b16 %v425
        %v545 = vunpack.c.l.b16 %v426
        %v546 = vunpack.c.h.b16 %v426
        %v547 = vunpack.c.l.b16 %v427
        %v548 = vunpack.c.h.b16 %v427
        %v549 = vunpack.c.l.b16 %v428
        %v550 = vunpack.c.h.b16 %v428
        %v551 = vunpack.c.l.b16 %v429
        %v552 = vunpack.c.h.b16 %v429
        %v553 = vunpack.c.l.b16 %v430
        %v554 = vunpack.c.h.b16 %v430
        %v555 = vunpack.c.l.b16 %v431
        %v556 = vunpack.c.h.b16 %v431
        %v557 = vunpack.c.l.b16 %v432
        %v558 = vunpack.c.h.b16 %v432
        %v559 = vunpack.c.l.b16 %v433
        %v560 = vunpack.c.h.b16 %v433
        %v561 = vunpack.c.l.b16 %v434
        %v562 = vunpack.c.h.b16 %v434
        %v563 = vunpack.c.l.b16 %v435
        %v564 = vunpack.c.h.b16 %v435
        %v565 = vunpack.c.l.b16 %v436
        %v566 = vunpack.c.h.b16 %v436
        %v567 = vpack.c.b16 %v507, %v503
        %v568 = vpack.c.b16 %v508, %v504
        %v569 = vpack.c.b16 %v509, %v505
        %v570 = vpack.c.b16 %v510, %v506
        %v571 = vpack.c.b16 %v515, %v511
        %v572 = vpack.c.b16 %v516, %v512
        %v573 = vpack.c.b16 %v517, %v513
        %v574 = vpack.c.b16 %v518, %v514
        %v575 = vpack.c.b16 %v523, %v519
        %v576 = vpack.c.b16 %v524, %v520
        %v577 = vpack.c.b16 %v525, %v521
        %v578 = vpack.c.b16 %v526, %v522
        %v579 = vpack.c.b16 %v531, %v527
        %v580 = vpack.c.b16 %v532, %v528
        %v581 = vpack.c.b16 %v533, %v529
        %v582 = vpack.c.b16 %v534, %v530
        %v583 = vpack.c.b16 %v539, %v535
        %v584 = vpack.c.b16 %v540, %v536
        %v585 = vpack.c.b16 %v541, %v537
        %v586 = vpack.c.b16 %v542, %v538
        %v587 = vpack.c.b16 %v547, %v543
        %v588 = vpack.c.b16 %v548, %v544
        %v589 = vpack.c.b16 %v549, %v545
        %v590 = vpack.c.b16 %v550, %v546
        %v591 = vpack.c.b16 %v555, %v551
        %v592 = vpack.c.b16 %v556, %v552
        %v593 = vpack.c.b16 %v557, %v553
        %v594 = vpack.c.b16 %v558, %v554
        %v595 = vpack.c.b16 %v563, %v559
        %v596 = vpack.c.b16 %v564, %v560
        %v597 = vpack.c.b16 %v565, %v561
        %v598 = vpack.c.b16 %v566, %v562
        %631 = vmatprep.subr.bf16.mxu0 %v596
        %632 = vmatpush1.bf16.msra.mxu0 %v595
        %633 = vmatprep.subr.bf16.mxu0 %v592
        %634 = vmatpush1.bf16.msra.mxu0 %v591
        %635 = vmatprep.subr.bf16.mxu0 %v588
        %636 = vmatpush1.bf16.msra.mxu0 %v587
        %637 = vmatprep.subr.bf16.mxu0 %v584
        %638 = vmatpush1.bf16.msra.mxu0 %v583
        %639 = vmatprep.subr.bf16.mxu0 %v580
        %640 = vmatpush1.bf16.msra.mxu0 %v579
        %641 = vmatprep.subr.bf16.mxu0 %v576
        %642 = vmatpush1.bf16.msra.mxu0 %v575
        %643 = vmatprep.subr.bf16.mxu0 %v572
        %644 = vmatpush1.bf16.msra.mxu0 %v571
        %645 = vmatprep.subr.bf16.mxu0 %v568
        %646 = vmatpush1.bf16.msra.mxu0 %v567
        %647 = vmatprep.subr.bf16.mxu0 0
        %648 = vmatpush2.bf16.msra.mxu0 0
        %649 = vmatprep.subr.bf16.mxu0 0
        %650 = vmatpush2.bf16.msra.mxu0 0
        %651 = vmatprep.subr.bf16.mxu0 0
        %652 = vmatpush2.bf16.msra.mxu0 0
        %653 = vmatprep.subr.bf16.mxu0 0
        %654 = vmatpush2.bf16.msra.mxu0 0
        %655 = vmatprep.subr.bf16.mxu0 0
        %656 = vmatpush2.bf16.msra.mxu0 0
        %657 = vmatprep.subr.bf16.mxu0 0
        %658 = vmatpush2.bf16.msra.mxu0 0
        %659 = vmatprep.subr.bf16.mxu0 0
        %660 = vmatpush2.bf16.msra.mxu0 0
        %661 = vmatprep.subr.bf16.mxu0 0
        %662 = vmatpush2.bf16.msra.mxu0 0
        %663 = vmatprep.mubr.bf16.mxu0 0
        %664 = vmatmul.mubr.bf16.gmra.mxu0 %v467
        %v665 = vpop.f32.mrf.mxu0
        %v666 = vadd.f32 %v442, %v665
        %v667 = vpop.f32.mrf.mxu0
        %v668 = vadd.f32 %v446, %v667
        %v669 = vpop.f32.mrf.mxu0
        %v670 = vadd.f32 %v442, %v669
        %v671 = vpop.f32.mrf.mxu0
        %v672 = vadd.f32 %v446, %v671
        %673 = vmatprep.mubr.bf16.mxu0 0
        %674 = vmatmul.mubr.bf16.gmra.mxu0 %v468
        %v675 = vpop.f32.mrf.mxu0
        %v676 = vadd.f32 %v442, %v675
        %v677 = vpop.f32.mrf.mxu0
        %v678 = vadd.f32 %v446, %v677
        %v679 = vpop.f32.mrf.mxu0
        %v680 = vadd.f32 %v442, %v679
        %v681 = vpop.f32.mrf.mxu0
        %v682 = vadd.f32 %v446, %v681
        %683 = vdwg.mxu0
        %684 = vmatprep.subr.bf16.mxu0 %v598
        %685 = vmatpush1.bf16.msra.mxu0 %v597
        %686 = vmatprep.subr.bf16.mxu0 %v594
        %687 = vmatpush1.bf16.msra.mxu0 %v593
        %688 = vmatprep.subr.bf16.mxu0 %v590
        %689 = vmatpush1.bf16.msra.mxu0 %v589
        %690 = vmatprep.subr.bf16.mxu0 %v586
        %691 = vmatpush1.bf16.msra.mxu0 %v585
        %692 = vmatprep.subr.bf16.mxu0 %v582
        %693 = vmatpush1.bf16.msra.mxu0 %v581
        %694 = vmatprep.subr.bf16.mxu0 %v578
        %695 = vmatpush1.bf16.msra.mxu0 %v577
        %696 = vmatprep.subr.bf16.mxu0 %v574
        %697 = vmatpush1.bf16.msra.mxu0 %v573
        %698 = vmatprep.subr.bf16.mxu0 %v570
        %699 = vmatpush1.bf16.msra.mxu0 %v569
        %700 = vmatprep.subr.bf16.mxu0 0
        %701 = vmatpush2.bf16.msra.mxu0 0
        %702 = vmatprep.subr.bf16.mxu0 0
        %703 = vmatpush2.bf16.msra.mxu0 0
        %704 = vmatprep.subr.bf16.mxu0 0
        %705 = vmatpush2.bf16.msra.mxu0 0
        %706 = vmatprep.subr.bf16.mxu0 0
        %707 = vmatpush2.bf16.msra.mxu0 0
        %708 = vmatprep.subr.bf16.mxu0 0
        %709 = vmatpush2.bf16.msra.mxu0 0
        %710 = vmatprep.subr.bf16.mxu0 0
        %711 = vmatpush2.bf16.msra.mxu0 0
        %712 = vmatprep.subr.bf16.mxu0 0
        %713 = vmatpush2.bf16.msra.mxu0 0
        %714 = vmatprep.subr.bf16.mxu0 0
        %715 = vmatpush2.bf16.msra.mxu0 0
        %716 = vmatprep.mubr.bf16.mxu0 0
        %717 = vmatmul.mubr.bf16.gmra.mxu0 %v467
        %v718 = vpop.f32.mrf.mxu0
        %v719 = vadd.f32 %v450, %v718
        %v720 = vpop.f32.mrf.mxu0
        %v721 = vadd.f32 %v454, %v720
        %v722 = vpop.f32.mrf.mxu0
        %v723 = vadd.f32 %v450, %v722
        %v724 = vpop.f32.mrf.mxu0
        %v725 = vadd.f32 %v454, %v724
        %726 = vmatprep.mubr.bf16.mxu0 0
        %727 = vmatmul.mubr.bf16.gmra.mxu0 %v468
        %v728 = vpop.f32.mrf.mxu0
        %v729 = vadd.f32 %v450, %v728
        %v730 = vpop.f32.mrf.mxu0
        %v731 = vadd.f32 %v454, %v730
        %v732 = vpop.f32.mrf.mxu0
        %v733 = vadd.f32 %v450, %v732
        %v734 = vpop.f32.mrf.mxu0
        %v735 = vadd.f32 %v454, %v734
        %736 = vdwg.mxu0
        %v737 = vpack.c.bf16 %v666, %v666
        %v738 = vpack.c.bf16 %v668, %v668
        %v739 = vpack.c.bf16 %v719, %v719
        %v740 = vpack.c.bf16 %v721, %v721
        %v741 = vpack.c.bf16 %v670, %v670
        %v742 = vpack.c.bf16 %v672, %v672
        %v743 = vpack.c.bf16 %v723, %v723
        %v744 = vpack.c.bf16 %v725, %v725
        %v745 = vpack.c.bf16 %v676, %v676
        %v746 = vpack.c.bf16 %v678, %v678
        %v747 = vpack.c.bf16 %v729, %v729
        %v748 = vpack.c.bf16 %v731, %v731
        %v749 = vpack.c.bf16 %v680, %v680
        %v750 = vpack.c.bf16 %v682, %v682
        %v751 = vpack.c.bf16 %v733, %v733
        %v752 = vpack.c.bf16 %v735, %v735
        %v769 = vunpack.c.l.b16 %v737
        %v770 = vunpack.c.l.b16 %v738
        %v771 = vunpack.c.l.b16 %v739
        %v772 = vunpack.c.l.b16 %v740
        %v773 = vunpack.c.l.b16 %v741
        %v774 = vunpack.c.l.b16 %v742
        %v775 = vunpack.c.l.b16 %v743
        %v776 = vunpack.c.l.b16 %v744
        %v777 = vunpack.c.l.b16 %v745
        %v778 = vunpack.c.l.b16 %v746
        %v779 = vunpack.c.l.b16 %v747
        %v780 = vunpack.c.l.b16 %v748
        %v781 = vunpack.c.l.b16 %v749
        %v782 = vunpack.c.l.b16 %v750
        %v783 = vunpack.c.l.b16 %v751
        %v784 = vunpack.c.l.b16 %v752
        %v785 = vpack.c.b16 %v770, %v769
        %v786 = vpack.c.b16 %v772, %v771
        %v787 = vpack.c.b16 %v774, %v773
        %v788 = vpack.c.b16 %v776, %v775
        %v789 = vpack.c.b16 %v778, %v777
        %v790 = vpack.c.b16 %v780, %v779
        %v791 = vpack.c.b16 %v782, %v781
        %v792 = vpack.c.b16 %v784, %v783
        %801 = vst [vmem:[#allocation2] sm:$0xff] %v785
        %802 = vst [vmem:[#allocation2 + $0x8] sm:$0xff] %v786
        %803 = vst [vmem:[#allocation2 + $0x10] sm:$0xff] %v787
        %804 = vst [vmem:[#allocation2 + $0x18] sm:$0xff] %v788
        %805 = vst [vmem:[#allocation2 + $0x20] sm:$0xff] %v789
        %806 = vst [vmem:[#allocation2 + $0x28] sm:$0xff] %v790
        %807 = vst [vmem:[#allocation2 + $0x30] sm:$0xff] %v791
        %808 = vst [vmem:[#allocation2 + $0x38] sm:$0xff] %v792
        %v809 = vld [vmem:[%s317] sm:$0xff]
        %v810 = vld [vmem:[%s317 + $0x8] sm:$0xff]
        %v811 = vld [vmem:[%s317 + $0x10] sm:$0xff]
        %v812 = vld [vmem:[%s317 + $0x18] sm:$0xff]
        %v813 = vld [vmem:[%s317 + $0x20] sm:$0xff]
        %v814 = vld [vmem:[%s317 + $0x28] sm:$0xff]
        %v815 = vld [vmem:[%s317 + $0x30] sm:$0xff]
        %v816 = vld [vmem:[%s317 + $0x38] sm:$0xff]
        %v817 = vld [vmem:[%s317 + $0x40] sm:$0xff]
        %v818 = vld [vmem:[%s317 + $0x48] sm:$0xff]
        %v819 = vld [vmem:[%s317 + $0x50] sm:$0xff]
        %v820 = vld [vmem:[%s317 + $0x58] sm:$0xff]
        %v821 = vld [vmem:[%s317 + $0x60] sm:$0xff]
        %v822 = vld [vmem:[%s317 + $0x68] sm:$0xff]
        %v823 = vld [vmem:[%s317 + $0x70] sm:$0xff]
        %v824 = vld [vmem:[%s317 + $0x78] sm:$0xff]
        %v825 = vld [vmem:[%s317 + $0x80] sm:$0xff]
        %v826 = vld [vmem:[%s317 + $0x88] sm:$0xff]
        %v827 = vld [vmem:[%s317 + $0x90] sm:$0xff]
        %v828 = vld [vmem:[%s317 + $0x98] sm:$0xff]
        %v829 = vld [vmem:[%s317 + $0xa0] sm:$0xff]
        %v830 = vld [vmem:[%s317 + $0xa8] sm:$0xff]
        %v831 = vld [vmem:[%s317 + $0xb0] sm:$0xff]
        %v832 = vld [vmem:[%s317 + $0xb8] sm:$0xff]
        %v833 = vld [vmem:[%s317 + $0xc0] sm:$0xff]
        %v834 = vld [vmem:[%s317 + $0xc8] sm:$0xff]
        %v835 = vld [vmem:[%s317 + $0xd0] sm:$0xff]
        %v836 = vld [vmem:[%s317 + $0xd8] sm:$0xff]
        %v837 = vld [vmem:[%s317 + $0xe0] sm:$0xff]
        %v838 = vld [vmem:[%s317 + $0xe8] sm:$0xff]
        %v839 = vld [vmem:[%s317 + $0xf0] sm:$0xff]
        %v840 = vld [vmem:[%s317 + $0xf8] sm:$0xff]
        %s841 = smul.u32 %s30, 8
        %s842 = scalar_lea.vmem [#allocation4], %s841
        %v843 = vld [vmem:[%s842] sm:$0xff]
        %s844 = scalar_lea.vmem [#allocation5], %s841
        %v845 = vld [vmem:[%s844] sm:$0xff]
        %v846 = vld [vmem:[#allocation2] sm:$0xff]
        %v847 = vld [vmem:[#allocation2 + $0x8] sm:$0xff]
        %v848 = vunpack.c.l.bf16 %v846
        %v849 = vunpack.c.h.bf16 %v846
        %v850 = vunpack.c.l.bf16 %v847
        %v851 = vunpack.c.h.bf16 %v847
        %v852 = vpack.c.bf16 %v843, %v843
        %v885 = vunpack.c.l.b16 %v809
        %v886 = vunpack.c.h.b16 %v809
        %v887 = vunpack.c.l.b16 %v810
        %v888 = vunpack.c.h.b16 %v810
        %v889 = vunpack.c.l.b16 %v811
        %v890 = vunpack.c.h.b16 %v811
        %v891 = vunpack.c.l.b16 %v812
        %v892 = vunpack.c.h.b16 %v812
        %v893 = vunpack.c.l.b16 %v813
        %v894 = vunpack.c.h.b16 %v813
        %v895 = vunpack.c.l.b16 %v814
        %v896 = vunpack.c.h.b16 %v814
        %v897 = vunpack.c.l.b16 %v815
        %v898 = vunpack.c.h.b16 %v815
        %v899 = vunpack.c.l.b16 %v816
        %v900 = vunpack.c.h.b16 %v816
        %v901 = vunpack.c.l.b16 %v817
        %v902 = vunpack.c.h.b16 %v817
        %v903 = vunpack.c.l.b16 %v818
        %v904 = vunpack.c.h.b16 %v818
        %v905 = vunpack.c.l.b16 %v819
        %v906 = vunpack.c.h.b16 %v819
        %v907 = vunpack.c.l.b16 %v820
        %v908 = vunpack.c.h.b16 %v820
        %v909 = vunpack.c.l.b16 %v821
        %v910 = vunpack.c.h.b16 %v821
        %v911 = vunpack.c.l.b16 %v822
        %v912 = vunpack.c.h.b16 %v822
        %v913 = vunpack.c.l.b16 %v823
        %v914 = vunpack.c.h.b16 %v823
        %v915 = vunpack.c.l.b16 %v824
        %v916 = vunpack.c.h.b16 %v824
        %v917 = vunpack.c.l.b16 %v825
        %v918 = vunpack.c.h.b16 %v825
        %v919 = vunpack.c.l.b16 %v826
        %v920 = vunpack.c.h.b16 %v826
        %v921 = vunpack.c.l.b16 %v827
        %v922 = vunpack.c.h.b16 %v827
        %v923 = vunpack.c.l.b16 %v828
        %v924 = vunpack.c.h.b16 %v828
        %v925 = vunpack.c.l.b16 %v829
        %v926 = vunpack.c.h.b16 %v829
        %v927 = vunpack.c.l.b16 %v830
        %v928 = vunpack.c.h.b16 %v830
        %v929 = vunpack.c.l.b16 %v831
        %v930 = vunpack.c.h.b16 %v831
        %v931 = vunpack.c.l.b16 %v832
        %v932 = vunpack.c.h.b16 %v832
        %v933 = vunpack.c.l.b16 %v833
        %v934 = vunpack.c.h.b16 %v833
        %v935 = vunpack.c.l.b16 %v834
        %v936 = vunpack.c.h.b16 %v834
        %v937 = vunpack.c.l.b16 %v835
        %v938 = vunpack.c.h.b16 %v835
        %v939 = vunpack.c.l.b16 %v836
        %v940 = vunpack.c.h.b16 %v836
        %v941 = vunpack.c.l.b16 %v837
        %v942 = vunpack.c.h.b16 %v837
        %v943 = vunpack.c.l.b16 %v838
        %v944 = vunpack.c.h.b16 %v838
        %v945 = vunpack.c.l.b16 %v839
        %v946 = vunpack.c.h.b16 %v839
        %v947 = vunpack.c.l.b16 %v840
        %v948 = vunpack.c.h.b16 %v840
        %v949 = vpack.c.b16 %v889, %v885
        %v950 = vpack.c.b16 %v890, %v886
        %v951 = vpack.c.b16 %v891, %v887
        %v952 = vpack.c.b16 %v892, %v888
        %v953 = vpack.c.b16 %v897, %v893
        %v954 = vpack.c.b16 %v898, %v894
        %v955 = vpack.c.b16 %v899, %v895
        %v956 = vpack.c.b16 %v900, %v896
        %v957 = vpack.c.b16 %v905, %v901
        %v958 = vpack.c.b16 %v906, %v902
        %v959 = vpack.c.b16 %v907, %v903
        %v960 = vpack.c.b16 %v908, %v904
        %v961 = vpack.c.b16 %v913, %v909
        %v962 = vpack.c.b16 %v914, %v910
        %v963 = vpack.c.b16 %v915, %v911
        %v964 = vpack.c.b16 %v916, %v912
        %v965 = vpack.c.b16 %v921, %v917
        %v966 = vpack.c.b16 %v922, %v918
        %v967 = vpack.c.b16 %v923, %v919
        %v968 = vpack.c.b16 %v924, %v920
        %v969 = vpack.c.b16 %v929, %v925
        %v970 = vpack.c.b16 %v930, %v926
        %v971 = vpack.c.b16 %v931, %v927
        %v972 = vpack.c.b16 %v932, %v928
        %v973 = vpack.c.b16 %v937, %v933
        %v974 = vpack.c.b16 %v938, %v934
        %v975 = vpack.c.b16 %v939, %v935
        %v976 = vpack.c.b16 %v940, %v936
        %v977 = vpack.c.b16 %v945, %v941
        %v978 = vpack.c.b16 %v946, %v942
        %v979 = vpack.c.b16 %v947, %v943
        %v980 = vpack.c.b16 %v948, %v944
        %1013 = vmatprep.subr.bf16.mxu0 %v978
        %1014 = vmatpush1.bf16.msra.mxu0 %v977
        %1015 = vmatprep.subr.bf16.mxu0 %v974
        %1016 = vmatpush1.bf16.msra.mxu0 %v973
        %1017 = vmatprep.subr.bf16.mxu0 %v970
        %1018 = vmatpush1.bf16.msra.mxu0 %v969
        %1019 = vmatprep.subr.bf16.mxu0 %v966
        %1020 = vmatpush1.bf16.msra.mxu0 %v965
        %1021 = vmatprep.subr.bf16.mxu0 %v962
        %1022 = vmatpush1.bf16.msra.mxu0 %v961
        %1023 = vmatprep.subr.bf16.mxu0 %v958
        %1024 = vmatpush1.bf16.msra.mxu0 %v957
        %1025 = vmatprep.subr.bf16.mxu0 %v954
        %1026 = vmatpush1.bf16.msra.mxu0 %v953
        %1027 = vmatprep.subr.bf16.mxu0 %v950
        %1028 = vmatpush1.bf16.msra.mxu0 %v949
        %1029 = vmatprep.subr.bf16.mxu0 0
        %1030 = vmatpush2.bf16.msra.mxu0 0
        %1031 = vmatprep.subr.bf16.mxu0 0
        %1032 = vmatpush2.bf16.msra.mxu0 0
        %1033 = vmatprep.subr.bf16.mxu0 0
        %1034 = vmatpush2.bf16.msra.mxu0 0
        %1035 = vmatprep.subr.bf16.mxu0 0
        %1036 = vmatpush2.bf16.msra.mxu0 0
        %1037 = vmatprep.subr.bf16.mxu0 0
        %1038 = vmatpush2.bf16.msra.mxu0 0
        %1039 = vmatprep.subr.bf16.mxu0 0
        %1040 = vmatpush2.bf16.msra.mxu0 0
        %1041 = vmatprep.subr.bf16.mxu0 0
        %1042 = vmatpush2.bf16.msra.mxu0 0
        %1043 = vmatprep.subr.bf16.mxu0 0
        %1044 = vmatpush2.bf16.msra.mxu0 0
        %1045 = vmatprep.mubr.bf16.mxu0 0
        %1046 = vmatmul.mubr.bf16.gmra.mxu0 %v852
        %v1047 = vpop.f32.mrf.mxu0
        %v1048 = vadd.f32 0.0, %v1047
        %v1049 = vpop.f32.mrf.mxu0
        %v1050 = vadd.f32 0.0, %v1049
        %v1051 = vpop.f32.mrf.mxu0
        %v1052 = vpop.f32.mrf.mxu0
        %1053 = vdwg.mxu0
        %1054 = vmatprep.subr.bf16.mxu0 %v980
        %1055 = vmatpush1.bf16.msra.mxu0 %v979
        %1056 = vmatprep.subr.bf16.mxu0 %v976
        %1057 = vmatpush1.bf16.msra.mxu0 %v975
        %1058 = vmatprep.subr.bf16.mxu0 %v972
        %1059 = vmatpush1.bf16.msra.mxu0 %v971
        %1060 = vmatprep.subr.bf16.mxu0 %v968
        %1061 = vmatpush1.bf16.msra.mxu0 %v967
        %1062 = vmatprep.subr.bf16.mxu0 %v964
        %1063 = vmatpush1.bf16.msra.mxu0 %v963
        %1064 = vmatprep.subr.bf16.mxu0 %v960
        %1065 = vmatpush1.bf16.msra.mxu0 %v959
        %1066 = vmatprep.subr.bf16.mxu0 %v956
        %1067 = vmatpush1.bf16.msra.mxu0 %v955
        %1068 = vmatprep.subr.bf16.mxu0 %v952
        %1069 = vmatpush1.bf16.msra.mxu0 %v951
        %1070 = vmatprep.subr.bf16.mxu0 0
        %1071 = vmatpush2.bf16.msra.mxu0 0
        %1072 = vmatprep.subr.bf16.mxu0 0
        %1073 = vmatpush2.bf16.msra.mxu0 0
        %1074 = vmatprep.subr.bf16.mxu0 0
        %1075 = vmatpush2.bf16.msra.mxu0 0
        %1076 = vmatprep.subr.bf16.mxu0 0
        %1077 = vmatpush2.bf16.msra.mxu0 0
        %1078 = vmatprep.subr.bf16.mxu0 0
        %1079 = vmatpush2.bf16.msra.mxu0 0
        %1080 = vmatprep.subr.bf16.mxu0 0
        %1081 = vmatpush2.bf16.msra.mxu0 0
        %1082 = vmatprep.subr.bf16.mxu0 0
        %1083 = vmatpush2.bf16.msra.mxu0 0
        %1084 = vmatprep.subr.bf16.mxu0 0
        %1085 = vmatpush2.bf16.msra.mxu0 0
        %1086 = vmatprep.mubr.bf16.mxu0 0
        %1087 = vmatmul.mubr.bf16.gmra.mxu0 %v852
        %v1088 = vpop.f32.mrf.mxu0
        %v1089 = vadd.f32 0.0, %v1088
        %v1090 = vpop.f32.mrf.mxu0
        %v1091 = vadd.f32 0.0, %v1090
        %v1092 = vpop.f32.mrf.mxu0
        %v1093 = vpop.f32.mrf.mxu0
        %1094 = vdwg.mxu0
        %v1095 = vadd.f32 %v848, %v1048
        %v1096 = vadd.f32 %v849, %v1050
        %v1097 = vadd.f32 %v850, %v1089
        %v1098 = vadd.f32 %v851, %v1091
        %v1099 = vxor.u32 %v1095, 2147483648
        %v1100 = vxor.u32 %v1096, 2147483648
        %v1101 = vxor.u32 %v1097, 2147483648
        %v1102 = vmul.f32 %v1099, 1.442695
        %v1103 = vpow.pop %v1102
        %v1104 = vmul.f32 %v1100, 1.442695
        %v1105 = vpow.pop %v1104
        %v1106 = vmul.f32 %v1101, 1.442695
        %v1107 = vpow.pop %v1106
        %v1108 = vadd.f32 %v1103, 1.0
        %v1109 = vadd.f32 %v1105, 1.0
        %v1110 = vadd.f32 %v1107, 1.0
        %v1111 = vrcp.pop %v1108
        %v1112 = vmul.f32 1.0, %v1111
        %v1113 = vrcp.pop %v1109
        %v1114 = vmul.f32 1.0, %v1113
        %v1115 = vrcp.pop %v1110
        %v1116 = vmul.f32 1.0, %v1115
        %v1117 = vtanh.pop %v1098
        %v1118 = vmul.f32 %v1114, %v845
        %v1119 = vmul.f32 %v1112, %v1117
        %v1120 = vadd.f32 %v1118, %v1119
        %v1121 = vtanh.pop %v1120
        %v1122 = vmul.f32 %v1116, %v1121
        %v1123 = vpack.c.bf16 %v1122, %v1122
        %1124 = vst [vmem:[#allocation3] sm:$0xf] %v1123
        %s1125 = scalar_lea.vmem [#allocation2], 16
        %v1126 = vld [vmem:[%s1125] sm:$0xff]
        %v1127 = vld [vmem:[%s1125 + $0x8] sm:$0xff]
        %v1128 = vunpack.c.l.bf16 %v1126
        %v1129 = vunpack.c.h.bf16 %v1126
        %v1130 = vunpack.c.l.bf16 %v1127
        %v1131 = vunpack.c.h.bf16 %v1127
        %1132 = vmatprep.subr.bf16.mxu0 %v978
        %1133 = vmatpush1.bf16.msra.mxu0 %v977
        %1134 = vmatprep.subr.bf16.mxu0 %v974
        %1135 = vmatpush1.bf16.msra.mxu0 %v973
        %1136 = vmatprep.subr.bf16.mxu0 %v970
        %1137 = vmatpush1.bf16.msra.mxu0 %v969
        %1138 = vmatprep.subr.bf16.mxu0 %v966
        %1139 = vmatpush1.bf16.msra.mxu0 %v965
        %1140 = vmatprep.subr.bf16.mxu0 %v962
        %1141 = vmatpush1.bf16.msra.mxu0 %v961
        %1142 = vmatprep.subr.bf16.mxu0 %v958
        %1143 = vmatpush1.bf16.msra.mxu0 %v957
        %1144 = vmatprep.subr.bf16.mxu0 %v954
        %1145 = vmatpush1.bf16.msra.mxu0 %v953
        %1146 = vmatprep.subr.bf16.mxu0 %v950
        %1147 = vmatpush1.bf16.msra.mxu0 %v949
        %1148 = vmatprep.subr.bf16.mxu0 0
        %1149 = vmatpush2.bf16.msra.mxu0 0
        %1150 = vmatprep.subr.bf16.mxu0 0
        %1151 = vmatpush2.bf16.msra.mxu0 0
        %1152 = vmatprep.subr.bf16.mxu0 0
        %1153 = vmatpush2.bf16.msra.mxu0 0
        %1154 = vmatprep.subr.bf16.mxu0 0
        %1155 = vmatpush2.bf16.msra.mxu0 0
        %1156 = vmatprep.subr.bf16.mxu0 0
        %1157 = vmatpush2.bf16.msra.mxu0 0
        %1158 = vmatprep.subr.bf16.mxu0 0
        %1159 = vmatpush2.bf16.msra.mxu0 0
        %1160 = vmatprep.subr.bf16.mxu0 0
        %1161 = vmatpush2.bf16.msra.mxu0 0
        %1162 = vmatprep.subr.bf16.mxu0 0
        %1163 = vmatpush2.bf16.msra.mxu0 0
        %1164 = vmatprep.mubr.bf16.mxu0 0
        %1165 = vmatmul.mubr.bf16.gmra.mxu0 %v1123
        %v1166 = vpop.f32.mrf.mxu0
        %v1167 = vadd.f32 0.0, %v1166
        %v1168 = vpop.f32.mrf.mxu0
        %v1169 = vadd.f32 0.0, %v1168
        %v1170 = vpop.f32.mrf.mxu0
        %v1171 = vpop.f32.mrf.mxu0
        %1172 = vdwg.mxu0
        %1173 = vmatprep.subr.bf16.mxu0 %v980
        %1174 = vmatpush1.bf16.msra.mxu0 %v979
        %1175 = vmatprep.subr.bf16.mxu0 %v976
        %1176 = vmatpush1.bf16.msra.mxu0 %v975
        %1177 = vmatprep.subr.bf16.mxu0 %v972
        %1178 = vmatpush1.bf16.msra.mxu0 %v971
        %1179 = vmatprep.subr.bf16.mxu0 %v968
        %1180 = vmatpush1.bf16.msra.mxu0 %v967
        %1181 = vmatprep.subr.bf16.mxu0 %v964
        %1182 = vmatpush1.bf16.msra.mxu0 %v963
        %1183 = vmatprep.subr.bf16.mxu0 %v960
        %1184 = vmatpush1.bf16.msra.mxu0 %v959
        %1185 = vmatprep.subr.bf16.mxu0 %v956
        %1186 = vmatpush1.bf16.msra.mxu0 %v955
        %1187 = vmatprep.subr.bf16.mxu0 %v952
        %1188 = vmatpush1.bf16.msra.mxu0 %v951
        %1189 = vmatprep.subr.bf16.mxu0 0
        %1190 = vmatpush2.bf16.msra.mxu0 0
        %1191 = vmatprep.subr.bf16.mxu0 0
        %1192 = vmatpush2.bf16.msra.mxu0 0
        %1193 = vmatprep.subr.bf16.mxu0 0
        %1194 = vmatpush2.bf16.msra.mxu0 0
        %1195 = vmatprep.subr.bf16.mxu0 0
        %1196 = vmatpush2.bf16.msra.mxu0 0
        %1197 = vmatprep.subr.bf16.mxu0 0
        %1198 = vmatpush2.bf16.msra.mxu0 0
        %1199 = vmatprep.subr.bf16.mxu0 0
        %1200 = vmatpush2.bf16.msra.mxu0 0
        %1201 = vmatprep.subr.bf16.mxu0 0
        %1202 = vmatpush2.bf16.msra.mxu0 0
        %1203 = vmatprep.subr.bf16.mxu0 0
        %1204 = vmatpush2.bf16.msra.mxu0 0
        %1205 = vmatprep.mubr.bf16.mxu0 0
        %1206 = vmatmul.mubr.bf16.gmra.mxu0 %v1123
        %v1207 = vpop.f32.mrf.mxu0
        %v1208 = vadd.f32 0.0, %v1207
        %v1209 = vpop.f32.mrf.mxu0
        %v1210 = vadd.f32 0.0, %v1209
        %v1211 = vpop.f32.mrf.mxu0
        %v1212 = vpop.f32.mrf.mxu0
        %1213 = vdwg.mxu0
        %v1214 = vadd.f32 %v1128, %v1167
        %v1215 = vadd.f32 %v1129, %v1169
        %v1216 = vadd.f32 %v1130, %v1208
        %v1217 = vadd.f32 %v1131, %v1210
        %v1218 = vxor.u32 %v1214, 2147483648
        %v1219 = vxor.u32 %v1215, 2147483648
        %v1220 = vxor.u32 %v1216, 2147483648
        %v1221 = vmul.f32 %v1218, 1.442695
        %v1222 = vpow.pop %v1221
        %v1223 = vmul.f32 %v1219, 1.442695
        %v1224 = vpow.pop %v1223
        %v1225 = vmul.f32 %v1220, 1.442695
        %v1226 = vpow.pop %v1225
        %v1227 = vadd.f32 %v1222, 1.0
        %v1228 = vadd.f32 %v1224, 1.0
        %v1229 = vadd.f32 %v1226, 1.0
        %v1230 = vrcp.pop %v1227
        %v1231 = vmul.f32 1.0, %v1230
        %v1232 = vrcp.pop %v1228
        %v1233 = vmul.f32 1.0, %v1232
        %v1234 = vrcp.pop %v1229
        %v1235 = vmul.f32 1.0, %v1234
        %v1236 = vtanh.pop %v1217
        %v1237 = vmul.f32 %v1233, %v1120
        %v1238 = vmul.f32 %v1231, %v1236
        %v1239 = vadd.f32 %v1237, %v1238
        %v1240 = vtanh.pop %v1239
        %v1241 = vmul.f32 %v1235, %v1240
        %v1242 = vpack.c.bf16 %v1241, %v1241
        %s1243 = scalar_lea.vmem [#allocation3], 4
        %1244 = vst [vmem:[%s1243] sm:$0xf] %v1242
        %s1245 = scalar_lea.vmem [#allocation2], 32
        %v1246 = vld [vmem:[%s1245] sm:$0xff]
        %v1247 = vld [vmem:[%s1245 + $0x8] sm:$0xff]
        %v1248 = vunpack.c.l.bf16 %v1246
        %v1249 = vunpack.c.h.bf16 %v1246
        %v1250 = vunpack.c.l.bf16 %v1247
        %v1251 = vunpack.c.h.bf16 %v1247
        %1252 = vmatprep.subr.bf16.mxu0 %v978
        %1253 = vmatpush1.bf16.msra.mxu0 %v977
        %1254 = vmatprep.subr.bf16.mxu0 %v974
        %1255 = vmatpush1.bf16.msra.mxu0 %v973
        %1256 = vmatprep.subr.bf16.mxu0 %v970
        %1257 = vmatpush1.bf16.msra.mxu0 %v969
        %1258 = vmatprep.subr.bf16.mxu0 %v966
        %1259 = vmatpush1.bf16.msra.mxu0 %v965
        %1260 = vmatprep.subr.bf16.mxu0 %v962
        %1261 = vmatpush1.bf16.msra.mxu0 %v961
        %1262 = vmatprep.subr.bf16.mxu0 %v958
        %1263 = vmatpush1.bf16.msra.mxu0 %v957
        %1264 = vmatprep.subr.bf16.mxu0 %v954
        %1265 = vmatpush1.bf16.msra.mxu0 %v953
        %1266 = vmatprep.subr.bf16.mxu0 %v950
        %1267 = vmatpush1.bf16.msra.mxu0 %v949
        %1268 = vmatprep.subr.bf16.mxu0 0
        %1269 = vmatpush2.bf16.msra.mxu0 0
        %1270 = vmatprep.subr.bf16.mxu0 0
        %1271 = vmatpush2.bf16.msra.mxu0 0
        %1272 = vmatprep.subr.bf16.mxu0 0
        %1273 = vmatpush2.bf16.msra.mxu0 0
        %1274 = vmatprep.subr.bf16.mxu0 0
        %1275 = vmatpush2.bf16.msra.mxu0 0
        %1276 = vmatprep.subr.bf16.mxu0 0
        %1277 = vmatpush2.bf16.msra.mxu0 0
        %1278 = vmatprep.subr.bf16.mxu0 0
        %1279 = vmatpush2.bf16.msra.mxu0 0
        %1280 = vmatprep.subr.bf16.mxu0 0
        %1281 = vmatpush2.bf16.msra.mxu0 0
        %1282 = vmatprep.subr.bf16.mxu0 0
        %1283 = vmatpush2.bf16.msra.mxu0 0
        %1284 = vmatprep.mubr.bf16.mxu0 0
        %1285 = vmatmul.mubr.bf16.gmra.mxu0 %v1242
        %v1286 = vpop.f32.mrf.mxu0
        %v1287 = vadd.f32 0.0, %v1286
        %v1288 = vpop.f32.mrf.mxu0
        %v1289 = vadd.f32 0.0, %v1288
        %v1290 = vpop.f32.mrf.mxu0
        %v1291 = vpop.f32.mrf.mxu0
        %1292 = vdwg.mxu0
        %1293 = vmatprep.subr.bf16.mxu0 %v980
        %1294 = vmatpush1.bf16.msra.mxu0 %v979
        %1295 = vmatprep.subr.bf16.mxu0 %v976
        %1296 = vmatpush1.bf16.msra.mxu0 %v975
        %1297 = vmatprep.subr.bf16.mxu0 %v972
        %1298 = vmatpush1.bf16.msra.mxu0 %v971
        %1299 = vmatprep.subr.bf16.mxu0 %v968
        %1300 = vmatpush1.bf16.msra.mxu0 %v967
        %1301 = vmatprep.subr.bf16.mxu0 %v964
        %1302 = vmatpush1.bf16.msra.mxu0 %v963
        %1303 = vmatprep.subr.bf16.mxu0 %v960
        %1304 = vmatpush1.bf16.msra.mxu0 %v959
        %1305 = vmatprep.subr.bf16.mxu0 %v956
        %1306 = vmatpush1.bf16.msra.mxu0 %v955
        %1307 = vmatprep.subr.bf16.mxu0 %v952
        %1308 = vmatpush1.bf16.msra.mxu0 %v951
        %1309 = vmatprep.subr.bf16.mxu0 0
        %1310 = vmatpush2.bf16.msra.mxu0 0
        %1311 = vmatprep.subr.bf16.mxu0 0
        %1312 = vmatpush2.bf16.msra.mxu0 0
        %1313 = vmatprep.subr.bf16.mxu0 0
        %1314 = vmatpush2.bf16.msra.mxu0 0
        %1315 = vmatprep.subr.bf16.mxu0 0
        %1316 = vmatpush2.bf16.msra.mxu0 0
        %1317 = vmatprep.subr.bf16.mxu0 0
        %1318 = vmatpush2.bf16.msra.mxu0 0
        %1319 = vmatprep.subr.bf16.mxu0 0
        %1320 = vmatpush2.bf16.msra.mxu0 0
        %1321 = vmatprep.subr.bf16.mxu0 0
        %1322 = vmatpush2.bf16.msra.mxu0 0
        %1323 = vmatprep.subr.bf16.mxu0 0
        %1324 = vmatpush2.bf16.msra.mxu0 0
        %1325 = vmatprep.mubr.bf16.mxu0 0
        %1326 = vmatmul.mubr.bf16.gmra.mxu0 %v1242
        %v1327 = vpop.f32.mrf.mxu0
        %v1328 = vadd.f32 0.0, %v1327
        %v1329 = vpop.f32.mrf.mxu0
        %v1330 = vadd.f32 0.0, %v1329
        %v1331 = vpop.f32.mrf.mxu0
        %v1332 = vpop.f32.mrf.mxu0
        %1333 = vdwg.mxu0
        %v1334 = vadd.f32 %v1248, %v1287
        %v1335 = vadd.f32 %v1249, %v1289
        %v1336 = vadd.f32 %v1250, %v1328
        %v1337 = vadd.f32 %v1251, %v1330
        %v1338 = vxor.u32 %v1334, 2147483648
        %v1339 = vxor.u32 %v1335, 2147483648
        %v1340 = vxor.u32 %v1336, 2147483648
        %v1341 = vmul.f32 %v1338, 1.442695
        %v1342 = vpow.pop %v1341
        %v1343 = vmul.f32 %v1339, 1.442695
        %v1344 = vpow.pop %v1343
        %v1345 = vmul.f32 %v1340, 1.442695
        %v1346 = vpow.pop %v1345
        %v1347 = vadd.f32 %v1342, 1.0
        %v1348 = vadd.f32 %v1344, 1.0
        %v1349 = vadd.f32 %v1346, 1.0
        %v1350 = vrcp.pop %v1347
        %v1351 = vmul.f32 1.0, %v1350
        %v1352 = vrcp.pop %v1348
        %v1353 = vmul.f32 1.0, %v1352
        %v1354 = vrcp.pop %v1349
        %v1355 = vmul.f32 1.0, %v1354
        %v1356 = vtanh.pop %v1337
        %v1357 = vmul.f32 %v1353, %v1239
        %v1358 = vmul.f32 %v1351, %v1356
        %v1359 = vadd.f32 %v1357, %v1358
        %v1360 = vtanh.pop %v1359
        %v1361 = vmul.f32 %v1355, %v1360
        %v1362 = vpack.c.bf16 %v1361, %v1361
        %s1363 = scalar_lea.vmem [#allocation3], 8
        %1364 = vst [vmem:[%s1363] sm:$0xf] %v1362
        %s1365 = scalar_lea.vmem [#allocation2], 48
        %v1366 = vld [vmem:[%s1365] sm:$0xff]
        %v1367 = vld [vmem:[%s1365 + $0x8] sm:$0xff]
        %v1368 = vunpack.c.l.bf16 %v1366
        %v1369 = vunpack.c.h.bf16 %v1366
        %v1370 = vunpack.c.l.bf16 %v1367
        %v1371 = vunpack.c.h.bf16 %v1367
        %1372 = vmatprep.subr.bf16.mxu0 %v978
        %1373 = vmatpush1.bf16.msra.mxu0 %v977
        %1374 = vmatprep.subr.bf16.mxu0 %v974
        %1375 = vmatpush1.bf16.msra.mxu0 %v973
        %1376 = vmatprep.subr.bf16.mxu0 %v970
        %1377 = vmatpush1.bf16.msra.mxu0 %v969
        %1378 = vmatprep.subr.bf16.mxu0 %v966
        %1379 = vmatpush1.bf16.msra.mxu0 %v965
        %1380 = vmatprep.subr.bf16.mxu0 %v962
        %1381 = vmatpush1.bf16.msra.mxu0 %v961
        %1382 = vmatprep.subr.bf16.mxu0 %v958
        %1383 = vmatpush1.bf16.msra.mxu0 %v957
        %1384 = vmatprep.subr.bf16.mxu0 %v954
        %1385 = vmatpush1.bf16.msra.mxu0 %v953
        %1386 = vmatprep.subr.bf16.mxu0 %v950
        %1387 = vmatpush1.bf16.msra.mxu0 %v949
        %1388 = vmatprep.subr.bf16.mxu0 0
        %1389 = vmatpush2.bf16.msra.mxu0 0
        %1390 = vmatprep.subr.bf16.mxu0 0
        %1391 = vmatpush2.bf16.msra.mxu0 0
        %1392 = vmatprep.subr.bf16.mxu0 0
        %1393 = vmatpush2.bf16.msra.mxu0 0
        %1394 = vmatprep.subr.bf16.mxu0 0
        %1395 = vmatpush2.bf16.msra.mxu0 0
        %1396 = vmatprep.subr.bf16.mxu0 0
        %1397 = vmatpush2.bf16.msra.mxu0 0
        %1398 = vmatprep.subr.bf16.mxu0 0
        %1399 = vmatpush2.bf16.msra.mxu0 0
        %1400 = vmatprep.subr.bf16.mxu0 0
        %1401 = vmatpush2.bf16.msra.mxu0 0
        %1402 = vmatprep.subr.bf16.mxu0 0
        %1403 = vmatpush2.bf16.msra.mxu0 0
        %1404 = vmatprep.mubr.bf16.mxu0 0
        %1405 = vmatmul.mubr.bf16.gmra.mxu0 %v1362
        %v1406 = vpop.f32.mrf.mxu0
        %v1407 = vadd.f32 0.0, %v1406
        %v1408 = vpop.f32.mrf.mxu0
        %v1409 = vadd.f32 0.0, %v1408
        %v1410 = vpop.f32.mrf.mxu0
        %v1411 = vpop.f32.mrf.mxu0
        %1412 = vdwg.mxu0
        %1413 = vmatprep.subr.bf16.mxu0 %v980
        %1414 = vmatpush1.bf16.msra.mxu0 %v979
        %1415 = vmatprep.subr.bf16.mxu0 %v976
        %1416 = vmatpush1.bf16.msra.mxu0 %v975
        %1417 = vmatprep.subr.bf16.mxu0 %v972
        %1418 = vmatpush1.bf16.msra.mxu0 %v971
        %1419 = vmatprep.subr.bf16.mxu0 %v968
        %1420 = vmatpush1.bf16.msra.mxu0 %v967
        %1421 = vmatprep.subr.bf16.mxu0 %v964
        %1422 = vmatpush1.bf16.msra.mxu0 %v963
        %1423 = vmatprep.subr.bf16.mxu0 %v960
        %1424 = vmatpush1.bf16.msra.mxu0 %v959
        %1425 = vmatprep.subr.bf16.mxu0 %v956
        %1426 = vmatpush1.bf16.msra.mxu0 %v955
        %1427 = vmatprep.subr.bf16.mxu0 %v952
        %1428 = vmatpush1.bf16.msra.mxu0 %v951
        %1429 = vmatprep.subr.bf16.mxu0 0
        %1430 = vmatpush2.bf16.msra.mxu0 0
        %1431 = vmatprep.subr.bf16.mxu0 0
        %1432 = vmatpush2.bf16.msra.mxu0 0
        %1433 = vmatprep.subr.bf16.mxu0 0
        %1434 = vmatpush2.bf16.msra.mxu0 0
        %1435 = vmatprep.subr.bf16.mxu0 0
        %1436 = vmatpush2.bf16.msra.mxu0 0
        %1437 = vmatprep.subr.bf16.mxu0 0
        %1438 = vmatpush2.bf16.msra.mxu0 0
        %1439 = vmatprep.subr.bf16.mxu0 0
        %1440 = vmatpush2.bf16.msra.mxu0 0
        %1441 = vmatprep.subr.bf16.mxu0 0
        %1442 = vmatpush2.bf16.msra.mxu0 0
        %1443 = vmatprep.subr.bf16.mxu0 0
        %1444 = vmatpush2.bf16.msra.mxu0 0
        %1445 = vmatprep.mubr.bf16.mxu0 0
        %1446 = vmatmul.mubr.bf16.gmra.mxu0 %v1362
        %v1447 = vpop.f32.mrf.mxu0
        %v1448 = vadd.f32 0.0, %v1447
        %v1449 = vpop.f32.mrf.mxu0
        %v1450 = vadd.f32 0.0, %v1449
        %v1451 = vpop.f32.mrf.mxu0
        %v1452 = vpop.f32.mrf.mxu0
        %1453 = vdwg.mxu0
        %v1454 = vadd.f32 %v1368, %v1407
        %v1455 = vadd.f32 %v1369, %v1409
        %v1456 = vadd.f32 %v1370, %v1448
        %v1457 = vadd.f32 %v1371, %v1450
        %v1458 = vxor.u32 %v1454, 2147483648
        %v1459 = vxor.u32 %v1455, 2147483648
        %v1460 = vxor.u32 %v1456, 2147483648
        %v1461 = vmul.f32 %v1458, 1.442695
        %v1462 = vpow.pop %v1461
        %v1463 = vmul.f32 %v1459, 1.442695
        %v1464 = vpow.pop %v1463
        %v1465 = vmul.f32 %v1460, 1.442695
        %v1466 = vpow.pop %v1465
        %v1467 = vadd.f32 %v1462, 1.0
        %v1468 = vadd.f32 %v1464, 1.0
        %v1469 = vadd.f32 %v1466, 1.0
        %v1470 = vrcp.pop %v1467
        %v1471 = vmul.f32 1.0, %v1470
        %v1472 = vrcp.pop %v1468
        %v1473 = vmul.f32 1.0, %v1472
        %v1474 = vrcp.pop %v1469
        %v1475 = vmul.f32 1.0, %v1474
        %v1476 = vtanh.pop %v1457
        %v1477 = vmul.f32 %v1473, %v1359
        %v1478 = vmul.f32 %v1471, %v1476
        %v1479 = vadd.f32 %v1477, %v1478
        %v1480 = vtanh.pop %v1479
        %v1481 = vmul.f32 %v1475, %v1480
        %v1482 = vpack.c.bf16 %v1481, %v1481
        %s1483 = scalar_lea.vmem [#allocation3], 12
        %1484 = vst [vmem:[%s1483] sm:$0xf] %v1482
        %1485 = vst [vmem:[%s842] sm:$0xff] %v1481
        %1486 = vst [vmem:[%s844] sm:$0xff] %v1479
        %p1487 = scmp.eq.s32.totalorder %s29, 1
        %p1488 = scmp.eq.s32.totalorder %s30, 1
        %p1489 = pnand %p1487, %p1488
        %p1490 = pneg %p1489
        // Predicated region
        $region61: #{lstm_forward.1} parent=43 // pred_check
          _
        $region62: #{lstm_forward.1} parent=43 // pred_check_branch
          %1492 = sbr.rel (%p1489) target = $region64
        $region63: #{lstm_forward.1} parent=43 // pred_region
          %v1493 = vld [vmem:[%s4] sm:$0xf]
          %v1494 = vld [vmem:[%s4 + $0x4] sm:$0xf]
          %v1495 = vld [vmem:[%s4 + $0x8] sm:$0xf]
          %v1496 = vld [vmem:[%s4 + $0xc] sm:$0xf]
          %v1497 = vld [vmem:[%s4 + $0x10] sm:$0xf]
          %v1498 = vld [vmem:[%s4 + $0x14] sm:$0xf]
          %v1499 = vld [vmem:[%s4 + $0x18] sm:$0xf]
          %v1500 = vld [vmem:[%s4 + $0x1c] sm:$0xf]
          %v1501 = vld [vmem:[%s4 + $0x20] sm:$0xf]
          %v1502 = vld [vmem:[%s4 + $0x24] sm:$0xf]
          %v1503 = vld [vmem:[%s4 + $0x28] sm:$0xf]
          %v1504 = vld [vmem:[%s4 + $0x2c] sm:$0xf]
          %v1505 = vld [vmem:[%s4 + $0x30] sm:$0xf]
          %v1506 = vld [vmem:[%s4 + $0x34] sm:$0xf]
          %v1507 = vld [vmem:[%s4 + $0x38] sm:$0xf]
          %v1508 = vld [vmem:[%s4 + $0x3c] sm:$0xf]
          %v1509 = vld [vmem:[%s5] sm:$0x1]
          %v1511 = vlaneseq
          %v1512 = vshrl.u32 %v1511, 7
          %v1513 = vsub.s32 0, %v1512
          %v1514 = vrot.slane %v1509, %v1513
          %v1532 = vunpack.c.l.b16 %v1493
          %v1533 = vunpack.c.l.b16 %v1494
          %v1534 = vunpack.c.l.b16 %v1495
          %v1535 = vunpack.c.l.b16 %v1496
          %v1536 = vunpack.c.l.b16 %v1497
          %v1537 = vunpack.c.l.b16 %v1498
          %v1538 = vunpack.c.l.b16 %v1499
          %v1539 = vunpack.c.l.b16 %v1500
          %v1540 = vunpack.c.l.b16 %v1501
          %v1541 = vunpack.c.l.b16 %v1502
          %v1542 = vunpack.c.l.b16 %v1503
          %v1543 = vunpack.c.l.b16 %v1504
          %v1544 = vunpack.c.l.b16 %v1505
          %v1545 = vunpack.c.l.b16 %v1506
          %v1546 = vunpack.c.l.b16 %v1507
          %v1547 = vunpack.c.l.b16 %v1508
          %v1548 = vpack.c.b16 %v1533, %v1532
          %v1549 = vpack.c.b16 %v1535, %v1534
          %v1550 = vpack.c.b16 %v1537, %v1536
          %v1551 = vpack.c.b16 %v1539, %v1538
          %v1552 = vpack.c.b16 %v1541, %v1540
          %v1553 = vpack.c.b16 %v1543, %v1542
          %v1554 = vpack.c.b16 %v1545, %v1544
          %v1555 = vpack.c.b16 %v1547, %v1546
          %1564 = vmatprep.subr.bf16.mxu0 0
          %1565 = vmatpush1.bf16.msra.mxu0 %v1555
          %1566 = vmatprep.subr.bf16.mxu0 0
          %1567 = vmatpush1.bf16.msra.mxu0 %v1554
          %1568 = vmatprep.subr.bf16.mxu0 0
          %1569 = vmatpush1.bf16.msra.mxu0 %v1553
          %1570 = vmatprep.subr.bf16.mxu0 0
          %1571 = vmatpush1.bf16.msra.mxu0 %v1552
          %1572 = vmatprep.subr.bf16.mxu0 0
          %1573 = vmatpush1.bf16.msra.mxu0 %v1551
          %1574 = vmatprep.subr.bf16.mxu0 0
          %1575 = vmatpush1.bf16.msra.mxu0 %v1550
          %1576 = vmatprep.subr.bf16.mxu0 0
          %1577 = vmatpush1.bf16.msra.mxu0 %v1549
          %1578 = vmatprep.subr.bf16.mxu0 0
          %1579 = vmatpush1.bf16.msra.mxu0 %v1548
          %1580 = vmatprep.subr.bf16.mxu0 0
          %1581 = vmatpush2.bf16.msra.mxu0 0
          %1582 = vmatprep.subr.bf16.mxu0 0
          %1583 = vmatpush2.bf16.msra.mxu0 0
          %1584 = vmatprep.subr.bf16.mxu0 0
          %1585 = vmatpush2.bf16.msra.mxu0 0
          %1586 = vmatprep.subr.bf16.mxu0 0
          %1587 = vmatpush2.bf16.msra.mxu0 0
          %1588 = vmatprep.subr.bf16.mxu0 0
          %1589 = vmatpush2.bf16.msra.mxu0 0
          %1590 = vmatprep.subr.bf16.mxu0 0
          %1591 = vmatpush2.bf16.msra.mxu0 0
          %1592 = vmatprep.subr.bf16.mxu0 0
          %1593 = vmatpush2.bf16.msra.mxu0 0
          %1594 = vmatprep.subr.bf16.mxu0 0
          %1595 = vmatpush2.bf16.msra.mxu0 0
          %1596 = vmatprep.mubr.bf16.mxu0 0
          %1597 = vmatmul.mubr.bf16.gmra.mxu0 %v1482
          %v1598 = vpop.f32.mrf.mxu0
          %v1599 = vadd.f32 %v1514, %v1598
          %v1600 = vpop.f32.mrf.mxu0
          %v1601 = vpop.f32.mrf.mxu0
          %v1602 = vpop.f32.mrf.mxu0
          %1603 = vdwg.mxu0
          %1604 = vst [vmem:[%s378] sm:$0xff] %v1599
        $region64: #{lstm_forward.1} parent=43 // pred_fallthru
          _
        %p1605 = scmp.lt.s32.totalorder %s28, 0
        %s1606 = scalar_select %p1605, %s28, 0
        %s1607 = smul.addr %s1606, 8
        %s1608 = scalar_lea.vmem %s6, %s1607
        // Predicated region
        $region65: #{lstm_forward.1} parent=43 // pred_check
          %p1609 = pneg %p208
        $region66: #{lstm_forward.1} parent=43 // pred_check_branch
          %1611 = sbr.rel (%p1609) target = $region68
        $region67: #{lstm_forward.1} parent=43 // pred_region
          _
        $region68: #{lstm_forward.1} parent=43 // pred_fallthru
          _
        // Predicated region
        $region69: #{lstm_forward.1} parent=43 // pred_check
          %p1612 = pneg %p208
        $region70: #{lstm_forward.1} parent=43 // pred_check_branch
          %1614 = sbr.rel (%p1612) target = $region72
        $region71: #{lstm_forward.1} parent=43 // pred_region
          %p1615 = scmp.lt.s32.totalorder %s28, 0
          %s1616 = scalar_select %p1615, %s28, 0
          %s1617 = smul.addr %s1616, 8
          %s1618 = scalar_lea.vmem %s6, %s1617
        $region72: #{lstm_forward.1} parent=43 // pred_fallthru
          _
      $region44: #{lstm_forward.1} parent=5 // pred_fallthru
        _
      %p1619 = scmp.le.s32.totalorder 2, %s18
      // Predicated region
      $region73: #{lstm_forward.1} parent=5 // pred_check
        %p1620 = pneg %p1619
      $region74: #{lstm_forward.1} parent=5 // pred_check_branch
        %1622 = sbr.rel (%p1620) target = $region76
      $region75: #{lstm_forward.1} parent=5 // pred_region
        %s1623 = ssub.s32 %s18, 2
      $region76: #{lstm_forward.1} parent=5 // pred_fallthru
        _
    $region6: #{lstm_forward.1} parent=1 // loop_footer
      %s22 = sadd.s32 1, %s18
    $region7: #{lstm_forward.1} parent=1 // loop_footer_branch
      %17 = sbr.rel target = $region3
    $region8: #{lstm_forward.1} parent=1 // loop_exit
      _
    %1624 = vsyncpa [#allocation7], 1
    %s1625 = scalar_lea.sflag [#allocation7], 1
    %1626 = vsyncpa %s1625, 1
    %1627 = vsyncpa [#allocation9], 1
    %s1628 = scalar_lea.sflag [#allocation9], 1
    %1629 = vsyncpa %s1628, 1

</llo_original>
